<compile_context>
chip_gen: v7x
topology: tpu7x:2x2x1
jax: 0.10.0
libtpu: 0.0.40
codegen_flags: <defaults>
</compile_context>

<pallas_src>
import functools

import jax
import jax.numpy as jnp
from jax import lax
from jax.experimental import pallas as pl
from jax.experimental.pallas import tpu as pltpu

_TILE_BYTES_TARGET = 4 << 20   # streamed bytes per grid step (x2 double-buffered)


def _round_up(x, m):
    return ((x + m - 1) // m) * m


def _loss_kernel(loc_p_ref, loc_g_ref, ctr_p_ref, ctr_g_ref,
                 cls_p_ref, cls_g_ref, mask_ref,
                 out_ref,
                 loc_acc, ctr_acc, cls_acc, npos_acc,
                 *, n_valid, n_cols, n_classes, exact_tiles):
    i = pl.program_id(1)
    n_tiles = pl.num_programs(1)

    @pl.when(i == 0)
    def _():
        loc_acc[...] = jnp.zeros_like(loc_acc)
        ctr_acc[...] = jnp.zeros_like(ctr_acc)
        cls_acc[...] = jnp.zeros_like(cls_acc)
        npos_acc[...] = jnp.zeros_like(npos_acc)

    t_cols = mask_ref.shape[-1]
    mask = mask_ref[0]                                   # (8, T)

    if exact_tiles:
        valid = None
        pos = mask > 0.0
    else:
        # Guard the padded tail of the (8, cols) fold and a partial last tile.
        row = lax.broadcasted_iota(jnp.int32, (8, t_cols), 0)
        col = lax.broadcasted_iota(jnp.int32, (8, t_cols), 1) + i * t_cols
        valid = jnp.logical_and(col < n_cols, row * n_cols + col < n_valid)
        pos = jnp.logical_and(valid, mask > 0.0)

    # ---------------- LocLoss: GIoU over positive samples ----------------
    l_p = loc_p_ref[0, 0]; t_p = loc_p_ref[0, 1]
    r_p = loc_p_ref[0, 2]; b_p = loc_p_ref[0, 3]
    l_g = loc_g_ref[0, 0]; t_g = loc_g_ref[0, 1]
    r_g = loc_g_ref[0, 2]; b_g = loc_g_ref[0, 3]
    area_pred = (l_p + r_p) * (t_p + b_p)
    area_gt = (l_g + r_g) * (t_g + b_g)
    area_g = (jnp.maximum(l_p, l_g) + jnp.maximum(r_p, r_g)) * \
             (jnp.maximum(t_p, t_g) + jnp.maximum(b_p, b_g))
    area_i = (jnp.minimum(r_p, r_g) + jnp.minimum(l_p, l_g)) * \
             (jnp.minimum(b_p, b_g) + jnp.minimum(t_p, t_g))
    area_u = area_gt + area_pred - area_i
    giou = area_i / area_u - (area_g - area_u) / jnp.maximum(area_g, 1e-6)
    loc_acc[...] += jnp.where(pos, 1.0 - giou, 0.0)

    # ------------- CenterLoss: BCE (torch-style -100 log clamp) -------------
    cp = ctr_p_ref[0]
    cg = ctr_g_ref[0]
    log_p = jnp.maximum(jnp.log(cp), -100.0)
    log_1p = jnp.maximum(jnp.log(1.0 - cp), -100.0)
    bce = -(cg * log_p + (1.0 - cg) * log_1p)
    ctr_acc[...] += jnp.where(pos, bce, 0.0)

    # ------ ClsLoss: focal over ALL valid samples, class-summed in-tile ------
    gid = cls_g_ref[0]                                   # (8, T) int32
    fl_sum = None
    for c in range(n_classes):                           # static unroll
        p_c = cls_p_ref[0, c]                            # (8, T)
        eq = gid == c                                    # bool one-hot row
        pt = jnp.where(eq, p_c, 1.0 - p_c)
        w = jnp.where(eq, 0.25, 0.75)                    # alpha = 0.25
        one_m = 1.0 - pt
        fl_c = -w * one_m * one_m * jnp.log(pt)          # gamma = 2
        fl_sum = fl_c if fl_sum is None else fl_sum + fl_c
    cls_acc[...] += fl_sum if valid is None else jnp.where(valid, fl_sum, 0.0)

    # ---------------- n_pos = sum(mask) over valid lanes ----------------
    npos_acc[...] += mask if valid is None else jnp.where(valid, mask, 0.0)

    # One cross-lane reduce + one unmasked lane-dense (1,128) store per row.
    @pl.when(i == n_tiles - 1)
    def _():
        lane = lax.broadcasted_iota(jnp.int32, (1, 128), 1)
        loc_s = jnp.sum(loc_acc[...])
        ctr_s = jnp.sum(ctr_acc[...])
        cls_s = jnp.sum(cls_acc[...])
        np_s = jnp.sum(npos_acc[...])
        out_ref[0] = (jnp.where(lane == 0, loc_s, 0.0) +
                      jnp.where(lane == 1, ctr_s, 0.0) +
                      jnp.where(lane == 2, cls_s, 0.0) +
                      jnp.where(lane == 3, np_s, 0.0))


def _level_sums(loc_p, loc_g, ctr_p, ctr_g, cls_p, cls_g, mask, tile_cols=None):
    """One FPN level.  Returns (B, 1, 128): lanes 0..3 hold
    (loc_sum, center_sum, cls_sum, sum(mask)) per batch row."""
    B, C, H, W = cls_p.shape
    HW = H * W
    cols = -(-HW // 8)                    # fold flat spatial axis into (8, cols)

    # Tile size on the folded (lane) axis: single tile if it fits the budget.
    bytes_per_col = (12 + C) * 8 * 4      # all streamed tables, f32/int32
    max_cols = max(128, (_TILE_BYTES_TARGET // bytes_per_col) // 128 * 128)
    t_cols = max_cols if tile_cols is None else tile_cols
    if t_cols >= cols:
        t_cols = cols                     # full-extent tile: no 128 alignment needed
    else:
        t_cols = min(_round_up(t_cols, 128), cols)
    n_tiles = pl.cdiv(cols, t_cols)
    hw_pad = 8 * cols
    exact = (hw_pad == HW) and (cols % t_cols == 0)

    def fold(x, c, dtype):
        # (B, c, H, W) -> (B, c, 8, cols): pure reshape (no copy) when HW % 8 == 0.
        x = jnp.asarray(x, dtype).reshape(B, c, HW)
        if hw_pad != HW:
            x = jnp.pad(x, ((0, 0), (0, 0), (0, hw_pad - HW)))
        return x.reshape(B, c, 8, cols)

    def fold1(x, dtype):
        # (B, H, W) -> (B, 8, cols)
        x = jnp.asarray(x, dtype).reshape(B, HW)
        if hw_pad != HW:
            x = jnp.pad(x, ((0, 0), (0, hw_pad - HW)))
        return x.reshape(B, 8, cols)

    spec4 = pl.BlockSpec((1, 4, 8, t_cols), lambda b, i: (b, 0, 0, i))
    specC = pl.BlockSpec((1, C, 8, t_cols), lambda b, i: (b, 0, 0, i))
    spec1 = pl.BlockSpec((1, 8, t_cols), lambda b, i: (b, 0, i))
    out_spec = pl.BlockSpec((1, 1, 128), lambda b, i: (b, 0, 0))

    kernel = functools.partial(_loss_kernel, n_valid=HW, n_cols=cols,
                               n_classes=C, exact_tiles=exact)

    return pl.pallas_call(
        kernel,
        grid=(B, n_tiles),
        in_specs=[spec4, spec4, spec1, spec1, specC, spec1, spec1],
        out_specs=out_spec,
        out_shape=jax.ShapeDtypeStruct((B, 1, 128), jnp.float32),
        scratch_shapes=[pltpu.VMEM((8, t_cols), jnp.float32) for _ in range(4)],
        compiler_params=pltpu.CompilerParams(
            dimension_semantics=("parallel", "arbitrary")),
    )(fold(loc_p, 4, jnp.float32), fold(loc_g, 4, jnp.float32),
      fold1(ctr_p, jnp.float32), fold1(ctr_g, jnp.float32),
      fold(cls_p, C, jnp.float32), fold1(cls_g, jnp.int32),
      fold1(mask, jnp.float32))


def loss_forward(loc_maps_pred, loc_maps_gt, center_maps_pred, center_maps_gt,
                 cls_maps_pred, cls_maps_gt, masks, tile_cols=None):
    """JAX/Pallas equivalent of torch `Loss.forward` on lists of NCHW / NHW maps."""
    totals = jnp.zeros((4,), jnp.float32)
    for l in range(len(loc_maps_pred)):
        # One pallas_call per level: folded layout is a free reshape, so no
        # concatenated copy of the inputs is ever materialized.
        part = _level_sums(loc_maps_pred[l], loc_maps_gt[l],
                           center_maps_pred[l], center_maps_gt[l],
                           cls_maps_pred[l], cls_maps_gt[l], masks[l],
                           tile_cols=tile_cols)
        totals = totals + jnp.sum(part[:, 0, :4], axis=0)
    n_pos = jnp.maximum(totals[3], 1.0)
    return totals[0] / n_pos, totals[1] / n_pos, totals[2] / n_pos


# ----------------------------- pure-JAX reference -----------------------------
def _reference(loc_p, loc_g, ctr_p, ctr_g, cls_p, cls_onehot, mask):
    mask = mask.reshape(-1)
    l_p, t_p, r_p, b_p = loc_p[:, 0], loc_p[:, 1], loc_p[:, 2], loc_p[:, 3]
    l_g, t_g, r_g, b_g = loc_g[:, 0], loc_g[:, 1], loc_g[:, 2], loc_g[:, 3]
    area_pred = (l_p + r_p) * (t_p + b_p)
    area_gt = (l_g + r_g) * (t_g + b_g)
    area_g = (jnp.maximum(l_p, l_g) + jnp.maximum(r_p, r_g)) * \
             (jnp.maximum(t_p, t_g) + jnp.maximum(b_p, b_g))
    area_i = (jnp.minimum(r_p, r_g) + jnp.minimum(l_p, l_g)) * \
             (jnp.minimum(b_p, b_g) + jnp.minimum(t_p, t_g))
    area_u = area_gt + area_pred - area_i
    giou = area_i / area_u - (area_g - area_u) / jnp.maximum(area_g, 1e-6)
    loc_sum = jnp.sum((1.0 - giou) * mask)
    cp, cg = ctr_p.reshape(-1), ctr_g.reshape(-1)
    log_p = jnp.maximum(jnp.log(cp), -100.0)
    log_1p = jnp.maximum(jnp.log(1.0 - cp), -100.0)
    ctr_sum = jnp.sum(-(cg * log_p + (1.0 - cg) * log_1p) * mask)
    pt = cls_p * cls_onehot + (1.0 - cls_p) * (1.0 - cls_onehot)
    w = 0.25 * cls_onehot + 0.75 * (1.0 - cls_onehot)
    cls_sum = jnp.sum(-w * (1.0 - pt) ** 2 * jnp.log(pt))
    n_pos = jnp.maximum(jnp.sum(mask), 1.0)
    return loc_sum / n_pos, ctr_sum / n_pos, cls_sum / n_pos


if __name__ == "__main__":
    def make_inputs(key, b, n_cls, sizes):
        loc_p, loc_g, ctr_p, ctr_g, cls_p, cls_g, msk = [], [], [], [], [], [], []
        for (h, w) in sizes:
            key, *ks = jax.random.split(key, 8)
            loc_p.append(jax.random.uniform(ks[0], (b, 4, h, w), jnp.float32, 0.5, 4.0))
            loc_g.append(jax.random.uniform(ks[1], (b, 4, h, w), jnp.float32, 0.5, 4.0))
            ctr_p.append(jax.nn.sigmoid(jax.random.normal(ks[2], (b, h, w), jnp.float32)))
            ctr_g.append(jax.random.uniform(ks[3], (b, h, w), jnp.float32, 0.0, 1.0))
            cls_p.append(jax.nn.sigmoid(jax.random.normal(ks[4], (b, n_cls, h, w), jnp.float32)))
            cls_g.append(jax.random.randint(ks[5], (b, h, w), 0, n_cls))
            msk.append(jax.random.bernoulli(ks[6], 0.3, (b, h, w)))
        return key, (loc_p, loc_g, ctr_p, ctr_g, cls_p, cls_g, msk)

    def reference(inputs, n_cls):
        loc_p, loc_g, ctr_p, ctr_g, cls_p, cls_g, msk = inputs
        lp = jnp.concatenate([jnp.transpose(x, (0, 2, 3, 1)).reshape(-1, 4) for x in loc_p])
        lg = jnp.concatenate([jnp.transpose(x, (0, 2, 3, 1)).reshape(-1, 4) for x in loc_g])
        cp = jnp.concatenate([x.reshape(-1) for x in ctr_p])
        cg = jnp.concatenate([x.reshape(-1) for x in ctr_g])
        kp = jnp.concatenate([jnp.transpose(x, (0, 2, 3, 1)).reshape(-1, n_cls) for x in cls_p])
        kg = jax.nn.one_hot(jnp.concatenate([x.reshape(-1) for x in cls_g]), n_cls,
                            dtype=jnp.float32)
        m = jnp.concatenate([x.reshape(-1) for x in msk]).astype(jnp.float32)
        return _reference(lp, lg, cp, cg, kp, kg, m)

    key = jax.random.PRNGKey(0)
    b, n_cls = 2, 8

    # Run 1: typical small FPN levels (incl. an odd 15x15 level that exercises the
    # padded-fold validity mask); each level is a single lane tile, grid (B, 1).
    key, inp1 = make_inputs(key, b, n_cls, [(16, 16), (16, 8), (15, 15)])
    out1 = loss_forward(*inp1)

    # Run 2: a bigger level with a forced 128-column tile -> cross-tile accumulation.
    key, inp2 = make_inputs(key, b, n_cls, [(32, 64), (16, 16)])
    out2 = loss_forward(*inp2, tile_cols=128)

    jax.block_until_ready((out1, out2))

    for out, inp in ((out1, inp1), (out2, inp2)):
        ref = reference(inp, n_cls)
        for got, want in zip(out, ref):
            assert jnp.allclose(got, want, rtol=1e-4, atol=1e-4), (got, want)

    print("KERNEL_OK")
</pallas_src>

<mosaic_0001>
module attributes {stable_mosaic.version = 11 : i64} {
  func.func @_loss_kernel(%arg0: i32, %arg1: i32, %arg2: memref<1x4x8x32xf32, #tpu.memory_space<vmem>>, %arg3: memref<1x4x8x32xf32, #tpu.memory_space<vmem>>, %arg4: memref<1x8x32xf32, #tpu.memory_space<vmem>>, %arg5: memref<1x8x32xf32, #tpu.memory_space<vmem>>, %arg6: memref<1x8x8x32xf32, #tpu.memory_space<vmem>>, %arg7: memref<1x8x32xi32, #tpu.memory_space<vmem>>, %arg8: memref<1x8x32xf32, #tpu.memory_space<vmem>>, %arg9: memref<1x1x128xf32, #tpu.memory_space<vmem>>, %arg10: memref<8x32xf32, #tpu.memory_space<vmem>>, %arg11: memref<8x32xf32, #tpu.memory_space<vmem>>, %arg12: memref<8x32xf32, #tpu.memory_space<vmem>>, %arg13: memref<8x32xf32, #tpu.memory_space<vmem>>) attributes {dimension_semantics = [#tpu.dimension_semantics<parallel>, #tpu.dimension_semantics<arbitrary>], iteration_bounds = array<i64: 2, 1>, scalar_prefetch = 0 : i64, scratch_operands = 4 : i64, tpu.core_type = #tpu.core_type<tc>, window_params = [{transform_indices = @transform_0, window_bounds = array<i64: 1, 4, 8, 32>}, {transform_indices = @transform_1, window_bounds = array<i64: 1, 4, 8, 32>}, {transform_indices = @transform_2, window_bounds = array<i64: 1, 8, 32>}, {transform_indices = @transform_3, window_bounds = array<i64: 1, 8, 32>}, {transform_indices = @transform_4, window_bounds = array<i64: 1, 8, 8, 32>}, {transform_indices = @transform_5, window_bounds = array<i64: 1, 8, 32>}, {transform_indices = @transform_6, window_bounds = array<i64: 1, 8, 32>}, {transform_indices = @transform_7, window_bounds = array<i64: 1, 1, 128>}]} {
    %c0_i32 = arith.constant 0 : i32
    %0 = arith.cmpi eq, %arg1, %c0_i32 : i32
    %1 = arith.extui %0 : i1 to i32
    %c0_i32_0 = arith.constant 0 : i32
    %2 = arith.cmpi ne, %1, %c0_i32_0 : i32
    scf.if %2 {
      %cst_137 = arith.constant 0.000000e+00 : f32
      %244 = vector.broadcast %cst_137 : f32 to vector<8x32xf32>
      %c0_138 = arith.constant 0 : index
      %c0_139 = arith.constant 0 : index
      %245 = vector.load %arg10[%c0_138, %c0_139] : memref<8x32xf32, #tpu.memory_space<vmem>>, vector<8x32xf32>
      tpu.vector_store %arg10[%c0_138, %c0_139], %244 {strides = array<i32>} : memref<8x32xf32, #tpu.memory_space<vmem>>, vector<8x32xf32>,
      %cst_140 = arith.constant 0.000000e+00 : f32
      %246 = vector.broadcast %cst_140 : f32 to vector<8x32xf32>
      %c0_141 = arith.constant 0 : index
      %c0_142 = arith.constant 0 : index
      %247 = vector.load %arg11[%c0_141, %c0_142] : memref<8x32xf32, #tpu.memory_space<vmem>>, vector<8x32xf32>
      tpu.vector_store %arg11[%c0_141, %c0_142], %246 {strides = array<i32>} : memref<8x32xf32, #tpu.memory_space<vmem>>, vector<8x32xf32>,
      %cst_143 = arith.constant 0.000000e+00 : f32
      %248 = vector.broadcast %cst_143 : f32 to vector<8x32xf32>
      %c0_144 = arith.constant 0 : index
      %c0_145 = arith.constant 0 : index
      %249 = vector.load %arg12[%c0_144, %c0_145] : memref<8x32xf32, #tpu.memory_space<vmem>>, vector<8x32xf32>
      tpu.vector_store %arg12[%c0_144, %c0_145], %248 {strides = array<i32>} : memref<8x32xf32, #tpu.memory_space<vmem>>, vector<8x32xf32>,
      %cst_146 = arith.constant 0.000000e+00 : f32
      %250 = vector.broadcast %cst_146 : f32 to vector<8x32xf32>
      %c0_147 = arith.constant 0 : index
      %c0_148 = arith.constant 0 : index
      %251 = vector.load %arg13[%c0_147, %c0_148] : memref<8x32xf32, #tpu.memory_space<vmem>>, vector<8x32xf32>
      tpu.vector_store %arg13[%c0_147, %c0_148], %250 {strides = array<i32>} : memref<8x32xf32, #tpu.memory_space<vmem>>, vector<8x32xf32>,
    } else {
    }
    %c0 = arith.constant 0 : index
    %c0_1 = arith.constant 0 : index
    %c0_2 = arith.constant 0 : index
    %3 = vector.load %arg8[%c0, %c0_1, %c0_2] : memref<1x8x32xf32, #tpu.memory_space<vmem>>, vector<1x8x32xf32>
    %4 = vector.shape_cast %3 : vector<1x8x32xf32> to vector<8x32xf32>
    %cst = arith.constant 0.000000e+00 : f32
    %5 = vector.broadcast %cst : f32 to vector<8x32xf32>
    %6 = arith.cmpf ogt, %4, %5 : vector<8x32xf32>
    %c0_3 = arith.constant 0 : index
    %c0_4 = arith.constant 0 : index
    %c0_5 = arith.constant 0 : index
    %c0_6 = arith.constant 0 : index
    %7 = vector.load %arg2[%c0_3, %c0_4, %c0_5, %c0_6] : memref<1x4x8x32xf32, #tpu.memory_space<vmem>>, vector<1x1x8x32xf32>
    %8 = vector.shape_cast %7 : vector<1x1x8x32xf32> to vector<8x32xf32>
    %c0_7 = arith.constant 0 : index
    %c1 = arith.constant 1 : index
    %c0_8 = arith.constant 0 : index
    %c0_9 = arith.constant 0 : index
    %9 = vector.load %arg2[%c0_7, %c1, %c0_8, %c0_9] : memref<1x4x8x32xf32, #tpu.memory_space<vmem>>, vector<1x1x8x32xf32>
    %10 = vector.shape_cast %9 : vector<1x1x8x32xf32> to vector<8x32xf32>
    %c0_10 = arith.constant 0 : index
    %c2 = arith.constant 2 : index
    %c0_11 = arith.constant 0 : index
    %c0_12 = arith.constant 0 : index
    %11 = vector.load %arg2[%c0_10, %c2, %c0_11, %c0_12] : memref<1x4x8x32xf32, #tpu.memory_space<vmem>>, vector<1x1x8x32xf32>
    %12 = vector.shape_cast %11 : vector<1x1x8x32xf32> to vector<8x32xf32>
    %c0_13 = arith.constant 0 : index
    %c3 = arith.constant 3 : index
    %c0_14 = arith.constant 0 : index
    %c0_15 = arith.constant 0 : index
    %13 = vector.load %arg2[%c0_13, %c3, %c0_14, %c0_15] : memref<1x4x8x32xf32, #tpu.memory_space<vmem>>, vector<1x1x8x32xf32>
    %14 = vector.shape_cast %13 : vector<1x1x8x32xf32> to vector<8x32xf32>
    %c0_16 = arith.constant 0 : index
    %c0_17 = arith.constant 0 : index
    %c0_18 = arith.constant 0 : index
    %c0_19 = arith.constant 0 : index
    %15 = vector.load %arg3[%c0_16, %c0_17, %c0_18, %c0_19] : memref<1x4x8x32xf32, #tpu.memory_space<vmem>>, vector<1x1x8x32xf32>
    %16 = vector.shape_cast %15 : vector<1x1x8x32xf32> to vector<8x32xf32>
    %c0_20 = arith.constant 0 : index
    %c1_21 = arith.constant 1 : index
    %c0_22 = arith.constant 0 : index
    %c0_23 = arith.constant 0 : index
    %17 = vector.load %arg3[%c0_20, %c1_21, %c0_22, %c0_23] : memref<1x4x8x32xf32, #tpu.memory_space<vmem>>, vector<1x1x8x32xf32>
    %18 = vector.shape_cast %17 : vector<1x1x8x32xf32> to vector<8x32xf32>
    %c0_24 = arith.constant 0 : index
    %c2_25 = arith.constant 2 : index
    %c0_26 = arith.constant 0 : index
    %c0_27 = arith.constant 0 : index
    %19 = vector.load %arg3[%c0_24, %c2_25, %c0_26, %c0_27] : memref<1x4x8x32xf32, #tpu.memory_space<vmem>>, vector<1x1x8x32xf32>
    %20 = vector.shape_cast %19 : vector<1x1x8x32xf32> to vector<8x32xf32>
    %c0_28 = arith.constant 0 : index
    %c3_29 = arith.constant 3 : index
    %c0_30 = arith.constant 0 : index
    %c0_31 = arith.constant 0 : index
    %21 = vector.load %arg3[%c0_28, %c3_29, %c0_30, %c0_31] : memref<1x4x8x32xf32, #tpu.memory_space<vmem>>, vector<1x1x8x32xf32>
    %22 = vector.shape_cast %21 : vector<1x1x8x32xf32> to vector<8x32xf32>
    %23 = arith.addf %8, %12 : vector<8x32xf32>
    %24 = arith.addf %10, %14 : vector<8x32xf32>
    %25 = arith.mulf %23, %24 : vector<8x32xf32>
    %26 = arith.addf %16, %20 : vector<8x32xf32>
    %27 = arith.addf %18, %22 : vector<8x32xf32>
    %28 = arith.mulf %26, %27 : vector<8x32xf32>
    %29 = arith.maximumf %8, %16 : vector<8x32xf32>
    %30 = arith.maximumf %12, %20 : vector<8x32xf32>
    %31 = arith.addf %29, %30 : vector<8x32xf32>
    %32 = arith.maximumf %10, %18 : vector<8x32xf32>
    %33 = arith.maximumf %14, %22 : vector<8x32xf32>
    %34 = arith.addf %32, %33 : vector<8x32xf32>
    %35 = arith.mulf %31, %34 : vector<8x32xf32>
    %36 = arith.minimumf %12, %20 : vector<8x32xf32>
    %37 = arith.minimumf %8, %16 : vector<8x32xf32>
    %38 = arith.addf %36, %37 : vector<8x32xf32>
    %39 = arith.minimumf %14, %22 : vector<8x32xf32>
    %40 = arith.minimumf %10, %18 : vector<8x32xf32>
    %41 = arith.addf %39, %40 : vector<8x32xf32>
    %42 = arith.mulf %38, %41 : vector<8x32xf32>
    %43 = arith.addf %28, %25 : vector<8x32xf32>
    %44 = arith.subf %43, %42 : vector<8x32xf32>
    %45 = arith.divf %42, %44 : vector<8x32xf32>
    %46 = arith.subf %35, %44 : vector<8x32xf32>
    %cst_32 = arith.constant 9.99999997E-7 : f32
    %47 = vector.broadcast %cst_32 : f32 to vector<8x32xf32>
    %48 = arith.maximumf %35, %47 : vector<8x32xf32>
    %49 = arith.divf %46, %48 : vector<8x32xf32>
    %50 = arith.subf %45, %49 : vector<8x32xf32>
    %c0_33 = arith.constant 0 : index
    %c0_34 = arith.constant 0 : index
    %51 = vector.load %arg10[%c0_33, %c0_34] : memref<8x32xf32, #tpu.memory_space<vmem>>, vector<8x32xf32>
    %cst_35 = arith.constant 1.000000e+00 : f32
    %52 = vector.broadcast %cst_35 : f32 to vector<8x32xf32>
    %53 = arith.subf %52, %50 : vector<8x32xf32>
    %cst_36 = arith.constant 0.000000e+00 : f32
    %54 = vector.broadcast %cst_36 : f32 to vector<8x32xf32>
    %55 = arith.select %6, %53, %54 : vector<8x32xi1>, vector<8x32xf32>
    %56 = arith.addf %51, %55 : vector<8x32xf32>
    %c0_37 = arith.constant 0 : index
    %c0_38 = arith.constant 0 : index
    %57 = vector.load %arg10[%c0_37, %c0_38] : memref<8x32xf32, #tpu.memory_space<vmem>>, vector<8x32xf32>
    tpu.vector_store %arg10[%c0_37, %c0_38], %56 {strides = array<i32>} : memref<8x32xf32, #tpu.memory_space<vmem>>, vector<8x32xf32>,
    %c0_39 = arith.constant 0 : index
    %c0_40 = arith.constant 0 : index
    %c0_41 = arith.constant 0 : index
    %58 = vector.load %arg4[%c0_39, %c0_40, %c0_41] : memref<1x8x32xf32, #tpu.memory_space<vmem>>, vector<1x8x32xf32>
    %59 = vector.shape_cast %58 : vector<1x8x32xf32> to vector<8x32xf32>
    %c0_42 = arith.constant 0 : index
    %c0_43 = arith.constant 0 : index
    %c0_44 = arith.constant 0 : index
    %60 = vector.load %arg5[%c0_42, %c0_43, %c0_44] : memref<1x8x32xf32, #tpu.memory_space<vmem>>, vector<1x8x32xf32>
    %61 = vector.shape_cast %60 : vector<1x8x32xf32> to vector<8x32xf32>
    %62 = math.log %59 : vector<8x32xf32>
    %cst_45 = arith.constant -1.000000e+02 : f32
    %63 = vector.broadcast %cst_45 : f32 to vector<8x32xf32>
    %64 = arith.maximumf %62, %63 : vector<8x32xf32>
    %cst_46 = arith.constant 1.000000e+00 : f32
    %65 = vector.broadcast %cst_46 : f32 to vector<8x32xf32>
    %66 = arith.subf %65, %59 : vector<8x32xf32>
    %67 = math.log %66 : vector<8x32xf32>
    %cst_47 = arith.constant -1.000000e+02 : f32
    %68 = vector.broadcast %cst_47 : f32 to vector<8x32xf32>
    %69 = arith.maximumf %67, %68 : vector<8x32xf32>
    %70 = arith.mulf %61, %64 : vector<8x32xf32>
    %cst_48 = arith.constant 1.000000e+00 : f32
    %71 = vector.broadcast %cst_48 : f32 to vector<8x32xf32>
    %72 = arith.subf %71, %61 : vector<8x32xf32>
    %73 = arith.mulf %72, %69 : vector<8x32xf32>
    %74 = arith.addf %70, %73 : vector<8x32xf32>
    %cst_49 = arith.constant 0.000000e+00 : f32
    %75 = vector.broadcast %cst_49 : f32 to vector<8x32xf32>
    %76 = arith.subf %75, %74 : vector<8x32xf32>
    %c0_50 = arith.constant 0 : index
    %c0_51 = arith.constant 0 : index
    %77 = vector.load %arg11[%c0_50, %c0_51] : memref<8x32xf32, #tpu.memory_space<vmem>>, vector<8x32xf32>
    %cst_52 = arith.constant 0.000000e+00 : f32
    %78 = vector.broadcast %cst_52 : f32 to vector<8x32xf32>
    %79 = arith.select %6, %76, %78 : vector<8x32xi1>, vector<8x32xf32>
    %80 = arith.addf %77, %79 : vector<8x32xf32>
    %c0_53 = arith.constant 0 : index
    %c0_54 = arith.constant 0 : index
    %81 = vector.load %arg11[%c0_53, %c0_54] : memref<8x32xf32, #tpu.memory_space<vmem>>, vector<8x32xf32>
    tpu.vector_store %arg11[%c0_53, %c0_54], %80 {strides = array<i32>} : memref<8x32xf32, #tpu.memory_space<vmem>>, vector<8x32xf32>,
    %c0_55 = arith.constant 0 : index
    %c0_56 = arith.constant 0 : index
    %c0_57 = arith.constant 0 : index
    %82 = vector.load %arg7[%c0_55, %c0_56, %c0_57] : memref<1x8x32xi32, #tpu.memory_space<vmem>>, vector<1x8x32xi32>
    %83 = vector.shape_cast %82 : vector<1x8x32xi32> to vector<8x32xi32>
    %c0_58 = arith.constant 0 : index
    %c0_59 = arith.constant 0 : index
    %c0_60 = arith.constant 0 : index
    %c0_61 = arith.constant 0 : index
    %84 = vector.load %arg6[%c0_58, %c0_59, %c0_60, %c0_61] : memref<1x8x8x32xf32, #tpu.memory_space<vmem>>, vector<1x1x8x32xf32>
    %85 = vector.shape_cast %84 : vector<1x1x8x32xf32> to vector<8x32xf32>
    %c0_i32_62 = arith.constant 0 : i32
    %86 = vector.broadcast %c0_i32_62 : i32 to vector<8x32xi32>
    %87 = arith.cmpi eq, %83, %86 : vector<8x32xi32>
    %cst_63 = arith.constant 1.000000e+00 : f32
    %88 = vector.broadcast %cst_63 : f32 to vector<8x32xf32>
    %89 = arith.subf %88, %85 : vector<8x32xf32>
    %90 = arith.select %87, %85, %89 : vector<8x32xi1>, vector<8x32xf32>
    %cst_64 = arith.constant 2.500000e-01 : f32
    %cst_65 = arith.constant 7.500000e-01 : f32
    %91 = vector.broadcast %cst_64 : f32 to vector<8x32xf32>
    %92 = vector.broadcast %cst_65 : f32 to vector<8x32xf32>
    %93 = arith.select %87, %91, %92 : vector<8x32xi1>, vector<8x32xf32>
    %cst_66 = arith.constant 1.000000e+00 : f32
    %94 = vector.broadcast %cst_66 : f32 to vector<8x32xf32>
    %95 = arith.subf %94, %90 : vector<8x32xf32>
    %cst_67 = arith.constant 0.000000e+00 : f32
    %96 = vector.broadcast %cst_67 : f32 to vector<8x32xf32>
    %97 = arith.subf %96, %93 : vector<8x32xf32>
    %98 = arith.mulf %97, %95 : vector<8x32xf32>
    %99 = arith.mulf %98, %95 : vector<8x32xf32>
    %100 = math.log %90 : vector<8x32xf32>
    %101 = arith.mulf %99, %100 : vector<8x32xf32>
    %c0_68 = arith.constant 0 : index
    %c1_69 = arith.constant 1 : index
    %c0_70 = arith.constant 0 : index
    %c0_71 = arith.constant 0 : index
    %102 = vector.load %arg6[%c0_68, %c1_69, %c0_70, %c0_71] : memref<1x8x8x32xf32, #tpu.memory_space<vmem>>, vector<1x1x8x32xf32>
    %103 = vector.shape_cast %102 : vector<1x1x8x32xf32> to vector<8x32xf32>
    %c1_i32 = arith.constant 1 : i32
    %104 = vector.broadcast %c1_i32 : i32 to vector<8x32xi32>
    %105 = arith.cmpi eq, %83, %104 : vector<8x32xi32>
    %cst_72 = arith.constant 1.000000e+00 : f32
    %106 = vector.broadcast %cst_72 : f32 to vector<8x32xf32>
    %107 = arith.subf %106, %103 : vector<8x32xf32>
    %108 = arith.select %105, %103, %107 : vector<8x32xi1>, vector<8x32xf32>
    %cst_73 = arith.constant 2.500000e-01 : f32
    %cst_74 = arith.constant 7.500000e-01 : f32
    %109 = vector.broadcast %cst_73 : f32 to vector<8x32xf32>
    %110 = vector.broadcast %cst_74 : f32 to vector<8x32xf32>
    %111 = arith.select %105, %109, %110 : vector<8x32xi1>, vector<8x32xf32>
    %cst_75 = arith.constant 1.000000e+00 : f32
    %112 = vector.broadcast %cst_75 : f32 to vector<8x32xf32>
    %113 = arith.subf %112, %108 : vector<8x32xf32>
    %cst_76 = arith.constant 0.000000e+00 : f32
    %114 = vector.broadcast %cst_76 : f32 to vector<8x32xf32>
    %115 = arith.subf %114, %111 : vector<8x32xf32>
    %116 = arith.mulf %115, %113 : vector<8x32xf32>
    %117 = arith.mulf %116, %113 : vector<8x32xf32>
    %118 = math.log %108 : vector<8x32xf32>
    %119 = arith.mulf %117, %118 : vector<8x32xf32>
    %120 = arith.addf %101, %119 : vector<8x32xf32>
    %c0_77 = arith.constant 0 : index
    %c2_78 = arith.constant 2 : index
    %c0_79 = arith.constant 0 : index
    %c0_80 = arith.constant 0 : index
    %121 = vector.load %arg6[%c0_77, %c2_78, %c0_79, %c0_80] : memref<1x8x8x32xf32, #tpu.memory_space<vmem>>, vector<1x1x8x32xf32>
    %122 = vector.shape_cast %121 : vector<1x1x8x32xf32> to vector<8x32xf32>
    %c2_i32 = arith.constant 2 : i32
    %123 = vector.broadcast %c2_i32 : i32 to vector<8x32xi32>
    %124 = arith.cmpi eq, %83, %123 : vector<8x32xi32>
    %cst_81 = arith.constant 1.000000e+00 : f32
    %125 = vector.broadcast %cst_81 : f32 to vector<8x32xf32>
    %126 = arith.subf %125, %122 : vector<8x32xf32>
    %127 = arith.select %124, %122, %126 : vector<8x32xi1>, vector<8x32xf32>
    %cst_82 = arith.constant 2.500000e-01 : f32
    %cst_83 = arith.constant 7.500000e-01 : f32
    %128 = vector.broadcast %cst_82 : f32 to vector<8x32xf32>
    %129 = vector.broadcast %cst_83 : f32 to vector<8x32xf32>
    %130 = arith.select %124, %128, %129 : vector<8x32xi1>, vector<8x32xf32>
    %cst_84 = arith.constant 1.000000e+00 : f32
    %131 = vector.broadcast %cst_84 : f32 to vector<8x32xf32>
    %132 = arith.subf %131, %127 : vector<8x32xf32>
    %cst_85 = arith.constant 0.000000e+00 : f32
    %133 = vector.broadcast %cst_85 : f32 to vector<8x32xf32>
    %134 = arith.subf %133, %130 : vector<8x32xf32>
    %135 = arith.mulf %134, %132 : vector<8x32xf32>
    %136 = arith.mulf %135, %132 : vector<8x32xf32>
    %137 = math.log %127 : vector<8x32xf32>
    %138 = arith.mulf %136, %137 : vector<8x32xf32>
    %139 = arith.addf %120, %138 : vector<8x32xf32>
    %c0_86 = arith.constant 0 : index
    %c3_87 = arith.constant 3 : index
    %c0_88 = arith.constant 0 : index
    %c0_89 = arith.constant 0 : index
    %140 = vector.load %arg6[%c0_86, %c3_87, %c0_88, %c0_89] : memref<1x8x8x32xf32, #tpu.memory_space<vmem>>, vector<1x1x8x32xf32>
    %141 = vector.shape_cast %140 : vector<1x1x8x32xf32> to vector<8x32xf32>
    %c3_i32 = arith.constant 3 : i32
    %142 = vector.broadcast %c3_i32 : i32 to vector<8x32xi32>
    %143 = arith.cmpi eq, %83, %142 : vector<8x32xi32>
    %cst_90 = arith.constant 1.000000e+00 : f32
    %144 = vector.broadcast %cst_90 : f32 to vector<8x32xf32>
    %145 = arith.subf %144, %141 : vector<8x32xf32>
    %146 = arith.select %143, %141, %145 : vector<8x32xi1>, vector<8x32xf32>
    %cst_91 = arith.constant 2.500000e-01 : f32
    %cst_92 = arith.constant 7.500000e-01 : f32
    %147 = vector.broadcast %cst_91 : f32 to vector<8x32xf32>
    %148 = vector.broadcast %cst_92 : f32 to vector<8x32xf32>
    %149 = arith.select %143, %147, %148 : vector<8x32xi1>, vector<8x32xf32>
    %cst_93 = arith.constant 1.000000e+00 : f32
    %150 = vector.broadcast %cst_93 : f32 to vector<8x32xf32>
    %151 = arith.subf %150, %146 : vector<8x32xf32>
    %cst_94 = arith.constant 0.000000e+00 : f32
    %152 = vector.broadcast %cst_94 : f32 to vector<8x32xf32>
    %153 = arith.subf %152, %149 : vector<8x32xf32>
    %154 = arith.mulf %153, %151 : vector<8x32xf32>
    %155 = arith.mulf %154, %151 : vector<8x32xf32>
    %156 = math.log %146 : vector<8x32xf32>
    %157 = arith.mulf %155, %156 : vector<8x32xf32>
    %158 = arith.addf %139, %157 : vector<8x32xf32>
    %c0_95 = arith.constant 0 : index
    %c4 = arith.constant 4 : index
    %c0_96 = arith.constant 0 : index
    %c0_97 = arith.constant 0 : index
    %159 = vector.load %arg6[%c0_95, %c4, %c0_96, %c0_97] : memref<1x8x8x32xf32, #tpu.memory_space<vmem>>, vector<1x1x8x32xf32>
    %160 = vector.shape_cast %159 : vector<1x1x8x32xf32> to vector<8x32xf32>
    %c4_i32 = arith.constant 4 : i32
    %161 = vector.broadcast %c4_i32 : i32 to vector<8x32xi32>
    %162 = arith.cmpi eq, %83, %161 : vector<8x32xi32>
    %cst_98 = arith.constant 1.000000e+00 : f32
    %163 = vector.broadcast %cst_98 : f32 to vector<8x32xf32>
    %164 = arith.subf %163, %160 : vector<8x32xf32>
    %165 = arith.select %162, %160, %164 : vector<8x32xi1>, vector<8x32xf32>
    %cst_99 = arith.constant 2.500000e-01 : f32
    %cst_100 = arith.constant 7.500000e-01 : f32
    %166 = vector.broadcast %cst_99 : f32 to vector<8x32xf32>
    %167 = vector.broadcast %cst_100 : f32 to vector<8x32xf32>
    %168 = arith.select %162, %166, %167 : vector<8x32xi1>, vector<8x32xf32>
    %cst_101 = arith.constant 1.000000e+00 : f32
    %169 = vector.broadcast %cst_101 : f32 to vector<8x32xf32>
    %170 = arith.subf %169, %165 : vector<8x32xf32>
    %cst_102 = arith.constant 0.000000e+00 : f32
    %171 = vector.broadcast %cst_102 : f32 to vector<8x32xf32>
    %172 = arith.subf %171, %168 : vector<8x32xf32>
    %173 = arith.mulf %172, %170 : vector<8x32xf32>
    %174 = arith.mulf %173, %170 : vector<8x32xf32>
    %175 = math.log %165 : vector<8x32xf32>
    %176 = arith.mulf %174, %175 : vector<8x32xf32>
    %177 = arith.addf %158, %176 : vector<8x32xf32>
    %c0_103 = arith.constant 0 : index
    %c5 = arith.constant 5 : index
    %c0_104 = arith.constant 0 : index
    %c0_105 = arith.constant 0 : index
    %178 = vector.load %arg6[%c0_103, %c5, %c0_104, %c0_105] : memref<1x8x8x32xf32, #tpu.memory_space<vmem>>, vector<1x1x8x32xf32>
    %179 = vector.shape_cast %178 : vector<1x1x8x32xf32> to vector<8x32xf32>
    %c5_i32 = arith.constant 5 : i32
    %180 = vector.broadcast %c5_i32 : i32 to vector<8x32xi32>
    %181 = arith.cmpi eq, %83, %180 : vector<8x32xi32>
    %cst_106 = arith.constant 1.000000e+00 : f32
    %182 = vector.broadcast %cst_106 : f32 to vector<8x32xf32>
    %183 = arith.subf %182, %179 : vector<8x32xf32>
    %184 = arith.select %181, %179, %183 : vector<8x32xi1>, vector<8x32xf32>
    %cst_107 = arith.constant 2.500000e-01 : f32
    %cst_108 = arith.constant 7.500000e-01 : f32
    %185 = vector.broadcast %cst_107 : f32 to vector<8x32xf32>
    %186 = vector.broadcast %cst_108 : f32 to vector<8x32xf32>
    %187 = arith.select %181, %185, %186 : vector<8x32xi1>, vector<8x32xf32>
    %cst_109 = arith.constant 1.000000e+00 : f32
    %188 = vector.broadcast %cst_109 : f32 to vector<8x32xf32>
    %189 = arith.subf %188, %184 : vector<8x32xf32>
    %cst_110 = arith.constant 0.000000e+00 : f32
    %190 = vector.broadcast %cst_110 : f32 to vector<8x32xf32>
    %191 = arith.subf %190, %187 : vector<8x32xf32>
    %192 = arith.mulf %191, %189 : vector<8x32xf32>
    %193 = arith.mulf %192, %189 : vector<8x32xf32>
    %194 = math.log %184 : vector<8x32xf32>
    %195 = arith.mulf %193, %194 : vector<8x32xf32>
    %196 = arith.addf %177, %195 : vector<8x32xf32>
    %c0_111 = arith.constant 0 : index
    %c6 = arith.constant 6 : index
    %c0_112 = arith.constant 0 : index
    %c0_113 = arith.constant 0 : index
    %197 = vector.load %arg6[%c0_111, %c6, %c0_112, %c0_113] : memref<1x8x8x32xf32, #tpu.memory_space<vmem>>, vector<1x1x8x32xf32>
    %198 = vector.shape_cast %197 : vector<1x1x8x32xf32> to vector<8x32xf32>
    %c6_i32 = arith.constant 6 : i32
    %199 = vector.broadcast %c6_i32 : i32 to vector<8x32xi32>
    %200 = arith.cmpi eq, %83, %199 : vector<8x32xi32>
    %cst_114 = arith.constant 1.000000e+00 : f32
    %201 = vector.broadcast %cst_114 : f32 to vector<8x32xf32>
    %202 = arith.subf %201, %198 : vector<8x32xf32>
    %203 = arith.select %200, %198, %202 : vector<8x32xi1>, vector<8x32xf32>
    %cst_115 = arith.constant 2.500000e-01 : f32
    %cst_116 = arith.constant 7.500000e-01 : f32
    %204 = vector.broadcast %cst_115 : f32 to vector<8x32xf32>
    %205 = vector.broadcast %cst_116 : f32 to vector<8x32xf32>
    %206 = arith.select %200, %204, %205 : vector<8x32xi1>, vector<8x32xf32>
    %cst_117 = arith.constant 1.000000e+00 : f32
    %207 = vector.broadcast %cst_117 : f32 to vector<8x32xf32>
    %208 = arith.subf %207, %203 : vector<8x32xf32>
    %cst_118 = arith.constant 0.000000e+00 : f32
    %209 = vector.broadcast %cst_118 : f32 to vector<8x32xf32>
    %210 = arith.subf %209, %206 : vector<8x32xf32>
    %211 = arith.mulf %210, %208 : vector<8x32xf32>
    %212 = arith.mulf %211, %208 : vector<8x32xf32>
    %213 = math.log %203 : vector<8x32xf32>
    %214 = arith.mulf %212, %213 : vector<8x32xf32>
    %215 = arith.addf %196, %214 : vector<8x32xf32>
    %c0_119 = arith.constant 0 : index
    %c7 = arith.constant 7 : index
    %c0_120 = arith.constant 0 : index
    %c0_121 = arith.constant 0 : index
    %216 = vector.load %arg6[%c0_119, %c7, %c0_120, %c0_121] : memref<1x8x8x32xf32, #tpu.memory_space<vmem>>, vector<1x1x8x32xf32>
    %217 = vector.shape_cast %216 : vector<1x1x8x32xf32> to vector<8x32xf32>
    %c7_i32 = arith.constant 7 : i32
    %218 = vector.broadcast %c7_i32 : i32 to vector<8x32xi32>
    %219 = arith.cmpi eq, %83, %218 : vector<8x32xi32>
    %cst_122 = arith.constant 1.000000e+00 : f32
    %220 = vector.broadcast %cst_122 : f32 to vector<8x32xf32>
    %221 = arith.subf %220, %217 : vector<8x32xf32>
    %222 = arith.select %219, %217, %221 : vector<8x32xi1>, vector<8x32xf32>
    %cst_123 = arith.constant 2.500000e-01 : f32
    %cst_124 = arith.constant 7.500000e-01 : f32
    %223 = vector.broadcast %cst_123 : f32 to vector<8x32xf32>
    %224 = vector.broadcast %cst_124 : f32 to vector<8x32xf32>
    %225 = arith.select %219, %223, %224 : vector<8x32xi1>, vector<8x32xf32>
    %cst_125 = arith.constant 1.000000e+00 : f32
    %226 = vector.broadcast %cst_125 : f32 to vector<8x32xf32>
    %227 = arith.subf %226, %222 : vector<8x32xf32>
    %cst_126 = arith.constant 0.000000e+00 : f32
    %228 = vector.broadcast %cst_126 : f32 to vector<8x32xf32>
    %229 = arith.subf %228, %225 : vector<8x32xf32>
    %230 = arith.mulf %229, %227 : vector<8x32xf32>
    %231 = arith.mulf %230, %227 : vector<8x32xf32>
    %232 = math.log %222 : vector<8x32xf32>
    %233 = arith.mulf %231, %232 : vector<8x32xf32>
    %234 = arith.addf %215, %233 : vector<8x32xf32>
    %c0_127 = arith.constant 0 : index
    %c0_128 = arith.constant 0 : index
    %235 = vector.load %arg12[%c0_127, %c0_128] : memref<8x32xf32, #tpu.memory_space<vmem>>, vector<8x32xf32>
    %236 = arith.addf %235, %234 : vector<8x32xf32>
    %c0_129 = arith.constant 0 : index
    %c0_130 = arith.constant 0 : index
    %237 = vector.load %arg12[%c0_129, %c0_130] : memref<8x32xf32, #tpu.memory_space<vmem>>, vector<8x32xf32>
    tpu.vector_store %arg12[%c0_129, %c0_130], %236 {strides = array<i32>} : memref<8x32xf32, #tpu.memory_space<vmem>>, vector<8x32xf32>,
    %c0_131 = arith.constant 0 : index
    %c0_132 = arith.constant 0 : index
    %238 = vector.load %arg13[%c0_131, %c0_132] : memref<8x32xf32, #tpu.memory_space<vmem>>, vector<8x32xf32>
    %239 = arith.addf %238, %4 : vector<8x32xf32>
    %c0_133 = arith.constant 0 : index
    %c0_134 = arith.constant 0 : index
    %240 = vector.load %arg13[%c0_133, %c0_134] : memref<8x32xf32, #tpu.memory_space<vmem>>, vector<8x32xf32>
    tpu.vector_store %arg13[%c0_133, %c0_134], %239 {strides = array<i32>} : memref<8x32xf32, #tpu.memory_space<vmem>>, vector<8x32xf32>,
    %c0_i32_135 = arith.constant 0 : i32
    %241 = arith.cmpi eq, %arg1, %c0_i32_135 : i32
    %242 = arith.extui %241 : i1 to i32
    %c0_i32_136 = arith.constant 0 : i32
    %243 = arith.cmpi ne, %242, %c0_i32_136 : i32
    scf.if %243 {
      %244 = tpu.iota {dimensions = array<i32: 1>} : vector<1x128xi32>
      %c0_137 = arith.constant 0 : index
      %c0_138 = arith.constant 0 : index
      %245 = vector.load %arg10[%c0_137, %c0_138] : memref<8x32xf32, #tpu.memory_space<vmem>>, vector<8x32xf32>
      %246 = vector.shape_cast %245 : vector<8x32xf32> to vector<1x8x32xf32>
      %cst_139 = arith.constant dense<0.000000e+00> : vector<1xf32>
      %247 = vector.multi_reduction <add>, %246, %cst_139 [1, 2] : vector<1x8x32xf32> to vector<1xf32>
      %248 = vector.shape_cast %247 : vector<1xf32> to vector<1x1x1xf32>
      %249 = vector.extract %248[0, 0, 0] : f32 from vector<1x1x1xf32>
      %c0_140 = arith.constant 0 : index
      %c0_141 = arith.constant 0 : index
      %250 = vector.load %arg11[%c0_140, %c0_141] : memref<8x32xf32, #tpu.memory_space<vmem>>, vector<8x32xf32>
      %251 = vector.shape_cast %250 : vector<8x32xf32> to vector<1x8x32xf32>
      %cst_142 = arith.constant dense<0.000000e+00> : vector<1xf32>
      %252 = vector.multi_reduction <add>, %251, %cst_142 [1, 2] : vector<1x8x32xf32> to vector<1xf32>
      %253 = vector.shape_cast %252 : vector<1xf32> to vector<1x1x1xf32>
      %254 = vector.extract %253[0, 0, 0] : f32 from vector<1x1x1xf32>
      %c0_143 = arith.constant 0 : index
      %c0_144 = arith.constant 0 : index
      %255 = vector.load %arg12[%c0_143, %c0_144] : memref<8x32xf32, #tpu.memory_space<vmem>>, vector<8x32xf32>
      %256 = vector.shape_cast %255 : vector<8x32xf32> to vector<1x8x32xf32>
      %cst_145 = arith.constant dense<0.000000e+00> : vector<1xf32>
      %257 = vector.multi_reduction <add>, %256, %cst_145 [1, 2] : vector<1x8x32xf32> to vector<1xf32>
      %258 = vector.shape_cast %257 : vector<1xf32> to vector<1x1x1xf32>
      %259 = vector.extract %258[0, 0, 0] : f32 from vector<1x1x1xf32>
      %c0_146 = arith.constant 0 : index
      %c0_147 = arith.constant 0 : index
      %260 = vector.load %arg13[%c0_146, %c0_147] : memref<8x32xf32, #tpu.memory_space<vmem>>, vector<8x32xf32>
      %261 = vector.shape_cast %260 : vector<8x32xf32> to vector<1x8x32xf32>
      %cst_148 = arith.constant dense<0.000000e+00> : vector<1xf32>
      %262 = vector.multi_reduction <add>, %261, %cst_148 [1, 2] : vector<1x8x32xf32> to vector<1xf32>
      %263 = vector.shape_cast %262 : vector<1xf32> to vector<1x1x1xf32>
      %264 = vector.extract %263[0, 0, 0] : f32 from vector<1x1x1xf32>
      %c0_i32_149 = arith.constant 0 : i32
      %265 = vector.broadcast %c0_i32_149 : i32 to vector<1x128xi32>
      %266 = arith.cmpi eq, %244, %265 : vector<1x128xi32>
      %cst_150 = arith.constant 0.000000e+00 : f32
      %267 = vector.broadcast %249 : f32 to vector<1x128xf32>
      %268 = vector.broadcast %cst_150 : f32 to vector<1x128xf32>
      %269 = arith.select %266, %267, %268 : vector<1x128xi1>, vector<1x128xf32>
      %c1_i32_151 = arith.constant 1 : i32
      %270 = vector.broadcast %c1_i32_151 : i32 to vector<1x128xi32>
      %271 = arith.cmpi eq, %244, %270 : vector<1x128xi32>
      %cst_152 = arith.constant 0.000000e+00 : f32
      %272 = vector.broadcast %254 : f32 to vector<1x128xf32>
      %273 = vector.broadcast %cst_152 : f32 to vector<1x128xf32>
      %274 = arith.select %271, %272, %273 : vector<1x128xi1>, vector<1x128xf32>
      %275 = arith.addf %269, %274 : vector<1x128xf32>
      %c2_i32_153 = arith.constant 2 : i32
      %276 = vector.broadcast %c2_i32_153 : i32 to vector<1x128xi32>
      %277 = arith.cmpi eq, %244, %276 : vector<1x128xi32>
      %cst_154 = arith.constant 0.000000e+00 : f32
      %278 = vector.broadcast %259 : f32 to vector<1x128xf32>
      %279 = vector.broadcast %cst_154 : f32 to vector<1x128xf32>
      %280 = arith.select %277, %278, %279 : vector<1x128xi1>, vector<1x128xf32>
      %281 = arith.addf %275, %280 : vector<1x128xf32>
      %c3_i32_155 = arith.constant 3 : i32
      %282 = vector.broadcast %c3_i32_155 : i32 to vector<1x128xi32>
      %283 = arith.cmpi eq, %244, %282 : vector<1x128xi32>
      %cst_156 = arith.constant 0.000000e+00 : f32
      %284 = vector.broadcast %264 : f32 to vector<1x128xf32>
      %285 = vector.broadcast %cst_156 : f32 to vector<1x128xf32>
      %286 = arith.select %283, %284, %285 : vector<1x128xi1>, vector<1x128xf32>
      %287 = arith.addf %281, %286 : vector<1x128xf32>
      %c0_157 = arith.constant 0 : index
      %c0_158 = arith.constant 0 : index
      %c0_159 = arith.constant 0 : index
      %288 = vector.load %arg9[%c0_157, %c0_158, %c0_159] : memref<1x1x128xf32, #tpu.memory_space<vmem>>, vector<1x1x128xf32>
      %289 = vector.shape_cast %288 : vector<1x1x128xf32> to vector<1x128xf32>
      %290 = vector.shape_cast %287 : vector<1x128xf32> to vector<1x1x128xf32>
      tpu.vector_store %arg9[%c0_157, %c0_158, %c0_159], %290 {strides = array<i32>} : memref<1x1x128xf32, #tpu.memory_space<vmem>>, vector<1x1x128xf32>,
    } else {
    }
    return
  }
  func.func @transform_0(%arg0: i32, %arg1: i32) -> (i32, i32, i32, i32) {
    %c0_i32 = arith.constant 0 : i32
    %c0_i32_0 = arith.constant 0 : i32
    %c0_i32_1 = arith.constant 0 : i32
    return %arg0, %c0_i32, %c0_i32_0, %arg1 : i32, i32, i32, i32
  }
  func.func @transform_1(%arg0: i32, %arg1: i32) -> (i32, i32, i32, i32) {
    %c0_i32 = arith.constant 0 : i32
    %c0_i32_0 = arith.constant 0 : i32
    %c0_i32_1 = arith.constant 0 : i32
    return %arg0, %c0_i32, %c0_i32_0, %arg1 : i32, i32, i32, i32
  }
  func.func @transform_2(%arg0: i32, %arg1: i32) -> (i32, i32, i32) {
    %c0_i32 = arith.constant 0 : i32
    %c0_i32_0 = arith.constant 0 : i32
    return %arg0, %c0_i32, %arg1 : i32, i32, i32
  }
  func.func @transform_3(%arg0: i32, %arg1: i32) -> (i32, i32, i32) {
    %c0_i32 = arith.constant 0 : i32
    %c0_i32_0 = arith.constant 0 : i32
    return %arg0, %c0_i32, %arg1 : i32, i32, i32
  }
  func.func @transform_4(%arg0: i32, %arg1: i32) -> (i32, i32, i32, i32) {
    %c0_i32 = arith.constant 0 : i32
    %c0_i32_0 = arith.constant 0 : i32
    %c0_i32_1 = arith.constant 0 : i32
    return %arg0, %c0_i32, %c0_i32_0, %arg1 : i32, i32, i32, i32
  }
  func.func @transform_5(%arg0: i32, %arg1: i32) -> (i32, i32, i32) {
    %c0_i32 = arith.constant 0 : i32
    %c0_i32_0 = arith.constant 0 : i32
    return %arg0, %c0_i32, %arg1 : i32, i32, i32
  }
  func.func @transform_6(%arg0: i32, %arg1: i32) -> (i32, i32, i32) {
    %c0_i32 = arith.constant 0 : i32
    %c0_i32_0 = arith.constant 0 : i32
    return %arg0, %c0_i32, %arg1 : i32, i32, i32
  }
  func.func @transform_7(%arg0: i32, %arg1: i32) -> (i32, i32, i32) {
    %c0_i32 = arith.constant 0 : i32
    %c0_i32_0 = arith.constant 0 : i32
    %c0_i32_1 = arith.constant 0 : i32
    return %arg0, %c0_i32, %c0_i32_0 : i32, i32, i32
  }
}

</mosaic_0001>

<llo_original>
// kernel: tpu_custom_call.1
$region0: #{tpu_custom_call.1}
  #allocation0 [shape = 'u32[]', space=smem, size = 0x4, offset = 0x4, fixed_abs, tag = 'smem constant byte address 0x4 - core index']
  #allocation1 [shape = 'u32[144,128]{1,0:T(1,128)}', space=vmem, size = 0x12000, scoped, tag = 'internal scratch']
  #allocation2 [shape = 'f32[8,32]{1,0:T(8,128)}', space=vmem, size = 0x1000, scoped, tag = 'scratch operand']
  #allocation3 [shape = 'f32[8,32]{1,0:T(8,128)}', space=vmem, size = 0x1000, scoped, tag = 'scratch operand']
  #allocation4 [shape = 'f32[8,32]{1,0:T(8,128)}', space=vmem, size = 0x1000, scoped, tag = 'scratch operand']
  #allocation5 [shape = 'f32[8,32]{1,0:T(8,128)}', space=vmem, size = 0x1000, scoped, tag = 'scratch operand']
  %s0 = inlined_call_operand.hbm [shape: f32[2,4,8,32], index: 0, kind: input, shape index: {}]
  %s1 = inlined_call_operand.hbm [shape: f32[2,4,8,32], index: 1, kind: input, shape index: {}]
  %s2 = inlined_call_operand.hbm [shape: f32[2,8,32], index: 2, kind: input, shape index: {}]
  %s3 = inlined_call_operand.hbm [shape: f32[2,8,32], index: 3, kind: input, shape index: {}]
  %s4 = inlined_call_operand.hbm [shape: f32[2,8,8,32], index: 4, kind: input, shape index: {}]
  %s5 = inlined_call_operand.vmem [shape: s32[2,8,32], index: 5, kind: input, shape index: {}]
  %s6 = inlined_call_operand.hbm [shape: f32[2,8,32], index: 6, kind: input, shape index: {}]
  %s7 = inlined_call_operand.hbm [shape: f32[2,1,128], index: 7, kind: output, shape index: {}]
  %s8 = sld [smem:[#allocation0]]
  $region93: #{tpu_custom_call.1} parent=0
    _
  %s10 = ssub.s32 1, %s8
  %s11 = scalar_select 0, %s10, %s8
  $region1: #{tpu_custom_call.1} parent=0
    #allocation6 [shape = 'u8[32768]{0}', space=vmem, size = 0x8000, scoped, tag = 'input window, operand 0']
    #allocation7 [shape = 's32[2]{0}', space=sflag, size = 0x8, scoped, tag = 'scoped memory for tpu_custom_call.1']
    #allocation8 [shape = 's32[2]{0}', space=sflag, size = 0x8, scoped, tag = 'scoped memory for tpu_custom_call.1']
    #allocation9 [shape = 'u8[32768]{0}', space=vmem, size = 0x8000, scoped, tag = 'input window, operand 1']
    #allocation10 [shape = 's32[2]{0}', space=sflag, size = 0x8, scoped, tag = 'scoped memory for tpu_custom_call.1']
    #allocation11 [shape = 'u8[8192]{0}', space=vmem, size = 0x2000, scoped, tag = 'input window, operand 2']
    #allocation12 [shape = 'u8[8192]{0}', space=vmem, size = 0x2000, scoped, tag = 'input window, operand 3']
    #allocation13 [shape = 's32[2]{0}', space=sflag, size = 0x8, scoped, tag = 'scoped memory for tpu_custom_call.1']
    #allocation14 [shape = 'u8[65536]{0}', space=vmem, size = 0x10000, scoped, tag = 'input window, operand 4']
    #allocation15 [shape = 'u8[8192]{0}', space=vmem, size = 0x2000, scoped, tag = 'input window, operand 6']
    #allocation16 [shape = 's32[2]{0}', space=sflag, size = 0x8, scoped, tag = 'scoped memory for tpu_custom_call.1']
    #allocation17 [shape = 'u8[1024]{0}', space=vmem, size = 0x400, scoped, tag = 'output window, operand 0']
    %12 = vsyncpa [#allocation7], 0
    %s13 = scalar_lea.sflag [#allocation7], 1
    %14 = vsyncpa %s13, 0
    %15 = vsyncpa [#allocation10], 0
    %s16 = scalar_lea.sflag [#allocation10], 1
    %17 = vsyncpa %s16, 0
    %18 = vsyncpa [#allocation13], 0
    %s19 = scalar_lea.sflag [#allocation13], 1
    %20 = vsyncpa %s19, 0
    %21 = vsyncpa [#allocation16], 0
    %s22 = scalar_lea.sflag [#allocation16], 1
    %23 = vsyncpa %s22, 0
    %24 = vsyncpa [#allocation8], 0
    %s25 = scalar_lea.sflag [#allocation8], 1
    %26 = vsyncpa %s25, 0
    loop: start=0, step=1, limit=4
    $region2: #{tpu_custom_call.1} parent=1 // loop_pre_header
      _
    $region3: #{tpu_custom_call.1} parent=1 // loop_header
      %s28 = sphi 0, %s32
      %p29 = scmp.ge.s32.totalorder %s28, 4
      %s35 = sphi 0, %s47
      %s36 = sphi 0, %s43
      %s37 = sphi 0, %s35
      %s38 = sphi 0, %s36
      %s39 = sphi 0, %s37
      %s40 = sphi 0, %s38
      %s52 = sphi 0, %s54
      %s55 = sphi 0, %s52
      %s56 = sphi 0, %s55
      %s72 = sphi 0, %s56
      %s80 = sphi 0, %s82
      %s83 = sphi 0, %s80
      %s84 = sphi 0, %s83
      %s100 = sphi 0, %s84
      %s108 = sphi 0, %s110
      %s111 = sphi 0, %s108
      %s112 = sphi 0, %s111
      %s128 = sphi 0, %s112
      %s136 = sphi 0, %s138
      %s139 = sphi 0, %s136
      %s140 = sphi 0, %s139
      %s156 = sphi 0, %s140
      %s164 = sphi 0, %s166
      %s167 = sphi 0, %s164
      %s168 = sphi 0, %s167
      %s184 = sphi 0, %s168
      %s192 = sphi 0, %s194
      %s195 = sphi 0, %s192
      %s196 = sphi 0, %s195
      %s212 = sphi 0, %s196
      %s220 = sphi 0, %s222
      %s223 = sphi 0, %s220
      %s224 = sphi 0, %s223
      %s240 = sphi 0, %s224
      %s246 = sphi 0, %s248
      %s249 = sphi 0, %s246
      %s250 = sphi 0, %s249
      %s266 = sphi 0, %s250
    $region4: #{tpu_custom_call.1} parent=1 // loop_header_branch
      %31 = sbr.rel (%p29) target = $region8
    $region5: #{tpu_custom_call.1} parent=1 // loop_body
      %s33 = ssub.s32 %s28, 1
      %s34 = ssub.s32 %s28, 2
      %s41 = sadd.s32 1, %s36
      %p42 = scmp.ge.s32.totalorder %s41, 1
      %s43 = scalar_select %p42, 0, %s41
      %s44 = sadd.s32 1, %s35
      %s45 = scalar_select %p42, %s44, %s35
      %p46 = scmp.ge.s32.totalorder %s45, 2
      %s47 = scalar_select %p46, 0, %s45
      %s48 = ssub.s32 %s35, %s47
      %s49 = ssub.s32 %s36, %s43
      %s50 = sor.u32 %s48, %s49
      %p51 = scmp.eq.s32.totalorder %s50, 0
      %s53 = sadd.s32 %s52, 1
      %s54 = scalar_select %p51, %s52, %s53
      %p57 = pneg %p51
      %p58 = scmp.eq.s32.totalorder %s28, 1
      %p59 = por %p57, %p58
      %p60 = scmp.ne.s32.totalorder %s52, %s55
      %p61 = scmp.eq.s32.totalorder %s28, 0
      %p62 = por %p60, %p61
      %p63 = scmp.ne.s32.totalorder %s52, %s55
      %p64 = scmp.eq.s32.totalorder %s33, 1
      %p65 = por %p63, %p64
      %p66 = scmp.ne.s32.totalorder %s55, %s56
      %p67 = scmp.eq.s32.totalorder %s33, 0
      %p68 = por %p66, %p67
      %p69 = scmp.ne.s32.totalorder %s55, %s56
      %p70 = scmp.eq.s32.totalorder %s34, 1
      %p71 = por %p69, %p70
      %p73 = scmp.ne.s32.totalorder %s56, %s72
      %p74 = scmp.eq.s32.totalorder %s34, 0
      %p75 = por %p73, %p74
      %s76 = ssub.s32 %s35, %s47
      %s77 = ssub.s32 %s36, %s43
      %s78 = sor.u32 %s76, %s77
      %p79 = scmp.eq.s32.totalorder %s78, 0
      %s81 = sadd.s32 %s80, 1
      %s82 = scalar_select %p79, %s80, %s81
      %p85 = pneg %p79
      %p86 = scmp.eq.s32.totalorder %s28, 1
      %p87 = por %p85, %p86
      %p88 = scmp.ne.s32.totalorder %s80, %s83
      %p89 = scmp.eq.s32.totalorder %s28, 0
      %p90 = por %p88, %p89
      %p91 = scmp.ne.s32.totalorder %s80, %s83
      %p92 = scmp.eq.s32.totalorder %s33, 1
      %p93 = por %p91, %p92
      %p94 = scmp.ne.s32.totalorder %s83, %s84
      %p95 = scmp.eq.s32.totalorder %s33, 0
      %p96 = por %p94, %p95
      %p97 = scmp.ne.s32.totalorder %s83, %s84
      %p98 = scmp.eq.s32.totalorder %s34, 1
      %p99 = por %p97, %p98
      %p101 = scmp.ne.s32.totalorder %s84, %s100
      %p102 = scmp.eq.s32.totalorder %s34, 0
      %p103 = por %p101, %p102
      %s104 = ssub.s32 %s35, %s47
      %s105 = ssub.s32 %s36, %s43
      %s106 = sor.u32 %s104, %s105
      %p107 = scmp.eq.s32.totalorder %s106, 0
      %s109 = sadd.s32 %s108, 1
      %s110 = scalar_select %p107, %s108, %s109
      %p113 = pneg %p107
      %p114 = scmp.eq.s32.totalorder %s28, 1
      %p115 = por %p113, %p114
      %p116 = scmp.ne.s32.totalorder %s108, %s111
      %p117 = scmp.eq.s32.totalorder %s28, 0
      %p118 = por %p116, %p117
      %p119 = scmp.ne.s32.totalorder %s108, %s111
      %p120 = scmp.eq.s32.totalorder %s33, 1
      %p121 = por %p119, %p120
      %p122 = scmp.ne.s32.totalorder %s111, %s112
      %p123 = scmp.eq.s32.totalorder %s33, 0
      %p124 = por %p122, %p123
      %p125 = scmp.ne.s32.totalorder %s111, %s112
      %p126 = scmp.eq.s32.totalorder %s34, 1
      %p127 = por %p125, %p126
      %p129 = scmp.ne.s32.totalorder %s112, %s128
      %p130 = scmp.eq.s32.totalorder %s34, 0
      %p131 = por %p129, %p130
      %s132 = ssub.s32 %s35, %s47
      %s133 = ssub.s32 %s36, %s43
      %s134 = sor.u32 %s132, %s133
      %p135 = scmp.eq.s32.totalorder %s134, 0
      %s137 = sadd.s32 %s136, 1
      %s138 = scalar_select %p135, %s136, %s137
      %p141 = pneg %p135
      %p142 = scmp.eq.s32.totalorder %s28, 1
      %p143 = por %p141, %p142
      %p144 = scmp.ne.s32.totalorder %s136, %s139
      %p145 = scmp.eq.s32.totalorder %s28, 0
      %p146 = por %p144, %p145
      %p147 = scmp.ne.s32.totalorder %s136, %s139
      %p148 = scmp.eq.s32.totalorder %s33, 1
      %p149 = por %p147, %p148
      %p150 = scmp.ne.s32.totalorder %s139, %s140
      %p151 = scmp.eq.s32.totalorder %s33, 0
      %p152 = por %p150, %p151
      %p153 = scmp.ne.s32.totalorder %s139, %s140
      %p154 = scmp.eq.s32.totalorder %s34, 1
      %p155 = por %p153, %p154
      %p157 = scmp.ne.s32.totalorder %s140, %s156
      %p158 = scmp.eq.s32.totalorder %s34, 0
      %p159 = por %p157, %p158
      %s160 = ssub.s32 %s35, %s47
      %s161 = ssub.s32 %s36, %s43
      %s162 = sor.u32 %s160, %s161
      %p163 = scmp.eq.s32.totalorder %s162, 0
      %s165 = sadd.s32 %s164, 1
      %s166 = scalar_select %p163, %s164, %s165
      %p169 = pneg %p163
      %p170 = scmp.eq.s32.totalorder %s28, 1
      %p171 = por %p169, %p170
      %p172 = scmp.ne.s32.totalorder %s164, %s167
      %p173 = scmp.eq.s32.totalorder %s28, 0
      %p174 = por %p172, %p173
      %p175 = scmp.ne.s32.totalorder %s164, %s167
      %p176 = scmp.eq.s32.totalorder %s33, 1
      %p177 = por %p175, %p176
      %p178 = scmp.ne.s32.totalorder %s167, %s168
      %p179 = scmp.eq.s32.totalorder %s33, 0
      %p180 = por %p178, %p179
      %p181 = scmp.ne.s32.totalorder %s167, %s168
      %p182 = scmp.eq.s32.totalorder %s34, 1
      %p183 = por %p181, %p182
      %p185 = scmp.ne.s32.totalorder %s168, %s184
      %p186 = scmp.eq.s32.totalorder %s34, 0
      %p187 = por %p185, %p186
      %s188 = ssub.s32 %s35, %s47
      %s189 = ssub.s32 %s36, %s43
      %s190 = sor.u32 %s188, %s189
      %p191 = scmp.eq.s32.totalorder %s190, 0
      %s193 = sadd.s32 %s192, 1
      %s194 = scalar_select %p191, %s192, %s193
      %p197 = pneg %p191
      %p198 = scmp.eq.s32.totalorder %s28, 1
      %p199 = por %p197, %p198
      %p200 = scmp.ne.s32.totalorder %s192, %s195
      %p201 = scmp.eq.s32.totalorder %s28, 0
      %p202 = por %p200, %p201
      %p203 = scmp.ne.s32.totalorder %s192, %s195
      %p204 = scmp.eq.s32.totalorder %s33, 1
      %p205 = por %p203, %p204
      %p206 = scmp.ne.s32.totalorder %s195, %s196
      %p207 = scmp.eq.s32.totalorder %s33, 0
      %p208 = por %p206, %p207
      %p209 = scmp.ne.s32.totalorder %s195, %s196
      %p210 = scmp.eq.s32.totalorder %s34, 1
      %p211 = por %p209, %p210
      %p213 = scmp.ne.s32.totalorder %s196, %s212
      %p214 = scmp.eq.s32.totalorder %s34, 0
      %p215 = por %p213, %p214
      %s216 = ssub.s32 %s35, %s47
      %s217 = ssub.s32 %s36, %s43
      %s218 = sor.u32 %s216, %s217
      %p219 = scmp.eq.s32.totalorder %s218, 0
      %s221 = sadd.s32 %s220, 1
      %s222 = scalar_select %p219, %s220, %s221
      %p225 = pneg %p219
      %p226 = scmp.eq.s32.totalorder %s28, 1
      %p227 = por %p225, %p226
      %p228 = scmp.ne.s32.totalorder %s220, %s223
      %p229 = scmp.eq.s32.totalorder %s28, 0
      %p230 = por %p228, %p229
      %p231 = scmp.ne.s32.totalorder %s220, %s223
      %p232 = scmp.eq.s32.totalorder %s33, 1
      %p233 = por %p231, %p232
      %p234 = scmp.ne.s32.totalorder %s223, %s224
      %p235 = scmp.eq.s32.totalorder %s33, 0
      %p236 = por %p234, %p235
      %p237 = scmp.ne.s32.totalorder %s223, %s224
      %p238 = scmp.eq.s32.totalorder %s34, 1
      %p239 = por %p237, %p238
      %p241 = scmp.ne.s32.totalorder %s224, %s240
      %p242 = scmp.eq.s32.totalorder %s34, 0
      %p243 = por %p241, %p242
      %s244 = ssub.s32 %s35, %s47
      %p245 = scmp.eq.s32.totalorder %s244, 0
      %s247 = sadd.s32 %s246, 1
      %s248 = scalar_select %p245, %s246, %s247
      %p251 = pneg %p245
      %p252 = scmp.eq.s32.totalorder %s28, 1
      %p253 = por %p251, %p252
      %p254 = scmp.ne.s32.totalorder %s246, %s249
      %p255 = scmp.eq.s32.totalorder %s28, 0
      %p256 = por %p254, %p255
      %p257 = scmp.ne.s32.totalorder %s246, %s249
      %p258 = scmp.eq.s32.totalorder %s33, 1
      %p259 = por %p257, %p258
      %p260 = scmp.ne.s32.totalorder %s249, %s250
      %p261 = scmp.eq.s32.totalorder %s33, 0
      %p262 = por %p260, %p261
      %p263 = scmp.ne.s32.totalorder %s249, %s250
      %p264 = scmp.eq.s32.totalorder %s34, 1
      %p265 = por %p263, %p264
      %p267 = scmp.ne.s32.totalorder %s250, %s266
      %p268 = scmp.eq.s32.totalorder %s34, 0
      %p269 = por %p267, %p268
      %p270 = scmp.le.s32.totalorder 1, %s28
      %p271 = scmp.lt.s32.totalorder %s28, 3
      %p272 = pnand %p270, %p271
      %p273 = pneg %p272
      // Predicated region
      $region9: #{tpu_custom_call.1} parent=5 // pred_check
        _
      $region10: #{tpu_custom_call.1} parent=5 // pred_check_branch
        %275 = sbr.rel (%p272) target = $region12
      $region11: #{tpu_custom_call.1} parent=5 // pred_region
        %s276 = ssub.s32 %s28, 1
      $region12: #{tpu_custom_call.1} parent=5 // pred_fallthru
        _
      %p277 = scmp.lt.s32.totalorder %s28, 2
      // Predicated region
      $region13: #{tpu_custom_call.1} parent=5 // pred_check
        %p278 = pneg %p277
      $region14: #{tpu_custom_call.1} parent=5 // pred_check_branch
        %280 = sbr.rel (%p278) target = $region16
      $region15: #{tpu_custom_call.1} parent=5 // pred_region
        // Predicated region
        $region17: #{tpu_custom_call.1} parent=15 // pred_check
          %p281 = pneg %p62
        $region18: #{tpu_custom_call.1} parent=15 // pred_check_branch
          %283 = sbr.rel (%p281) target = $region20
        $region19: #{tpu_custom_call.1} parent=15 // pred_region
          %s284 = sand.u32 %s52, 1
          %s285 = scalar_lea.sflag [#allocation7], %s284
          %s286 = sand.u32 %s52, 1
          %s287 = smul.addr %s286, 32
          %s288 = scalar_lea.vmem [#allocation6], %s287
          %s290 = ssub.s32 512, 512
          %291 = vsyncadd %s285, %s290
          %s292 = smul.addr %s35, 4
          %s293 = sadd.s32 %s36, %s292
          %s294 = smul.addr %s293, 128
          %s295 = scalar_lea.hbm %s0, %s294
          %s296 = sshll.u32 %s288, 4
          %s297 = int_to_ptr.vmem [resolvable:$true] %s296
          %302 = dma.hbm_to_vmem [thread:$0]  %s295, 512, %s297, %s285, 128, 128, 8
        $region20: #{tpu_custom_call.1} parent=15 // pred_fallthru
          _
        // Predicated region
        $region21: #{tpu_custom_call.1} parent=15 // pred_check
          %p303 = pneg %p90
        $region22: #{tpu_custom_call.1} parent=15 // pred_check_branch
          %305 = sbr.rel (%p303) target = $region24
        $region23: #{tpu_custom_call.1} parent=15 // pred_region
          %s306 = sand.u32 %s28, 1
          %s307 = scalar_lea.sflag [#allocation10], %s306
          %s308 = sand.u32 %s80, 1
          %s309 = smul.addr %s308, 32
          %s310 = scalar_lea.vmem [#allocation9], %s309
          %s312 = ssub.s32 512, 512
          %313 = vsyncadd %s307, %s312
          %s314 = smul.addr %s35, 4
          %s315 = sadd.s32 %s36, %s314
          %s316 = smul.addr %s315, 128
          %s317 = scalar_lea.hbm %s1, %s316
          %s318 = sshll.u32 %s310, 4
          %s319 = int_to_ptr.vmem [resolvable:$true] %s318
          %324 = dma.hbm_to_vmem [thread:$0]  %s317, 512, %s319, %s307, 128, 128, 8
        $region24: #{tpu_custom_call.1} parent=15 // pred_fallthru
          _
        // Predicated region
        $region25: #{tpu_custom_call.1} parent=15 // pred_check
          %p325 = pneg %p118
        $region26: #{tpu_custom_call.1} parent=15 // pred_check_branch
          %327 = sbr.rel (%p325) target = $region28
        $region27: #{tpu_custom_call.1} parent=15 // pred_region
          %s328 = sand.u32 %s28, 1
          %s329 = scalar_lea.sflag [#allocation10], %s328
          %s330 = sand.u32 %s108, 1
          %s331 = smul.addr %s330, 8
          %s332 = scalar_lea.vmem [#allocation11], %s331
          %s334 = ssub.s32 128, 128
          %335 = vsyncadd %s329, %s334
          %s336 = sadd.s32 %s36, %s35
          %s337 = smul.addr %s336, 128
          %s338 = scalar_lea.hbm %s2, %s337
          %s340 = sshll.u32 %s332, 4
          %s341 = int_to_ptr.vmem [resolvable:$true] %s340
          %343 = dma.hbm_to_vmem [thread:$0]  %s338, 128, %s341, %s329
        $region28: #{tpu_custom_call.1} parent=15 // pred_fallthru
          _
        // Predicated region
        $region29: #{tpu_custom_call.1} parent=15 // pred_check
          %p344 = pneg %p146
        $region30: #{tpu_custom_call.1} parent=15 // pred_check_branch
          %346 = sbr.rel (%p344) target = $region32
        $region31: #{tpu_custom_call.1} parent=15 // pred_region
          %s347 = sand.u32 %s28, 1
          %s348 = scalar_lea.sflag [#allocation13], %s347
          %s349 = sand.u32 %s136, 1
          %s350 = smul.addr %s349, 8
          %s351 = scalar_lea.vmem [#allocation12], %s350
          %s353 = ssub.s32 128, 128
          %354 = vsyncadd %s348, %s353
          %s355 = sadd.s32 %s36, %s35
          %s356 = smul.addr %s355, 128
          %s357 = scalar_lea.hbm %s3, %s356
          %s359 = sshll.u32 %s351, 4
          %s360 = int_to_ptr.vmem [resolvable:$true] %s359
          %362 = dma.hbm_to_vmem [thread:$0]  %s357, 128, %s360, %s348
        $region32: #{tpu_custom_call.1} parent=15 // pred_fallthru
          _
        // Predicated region
        $region33: #{tpu_custom_call.1} parent=15 // pred_check
          %p363 = pneg %p174
        $region34: #{tpu_custom_call.1} parent=15 // pred_check_branch
          %365 = sbr.rel (%p363) target = $region36
        $region35: #{tpu_custom_call.1} parent=15 // pred_region
          %s366 = sand.u32 %s28, 1
          %s367 = scalar_lea.sflag [#allocation13], %s366
          %s368 = sand.u32 %s164, 1
          %s369 = smul.addr %s368, 64
          %s370 = scalar_lea.vmem [#allocation14], %s369
          %s372 = ssub.s32 1024, 1024
          %373 = vsyncadd %s367, %s372
          %s374 = smul.addr %s35, 8
          %s375 = sadd.s32 %s36, %s374
          %s376 = smul.addr %s375, 128
          %s377 = scalar_lea.hbm %s4, %s376
          %s378 = sshll.u32 %s370, 4
          %s379 = int_to_ptr.vmem [resolvable:$true] %s378
          %384 = dma.hbm_to_vmem [thread:$0]  %s377, 1024, %s379, %s367, 128, 128, 8
        $region36: #{tpu_custom_call.1} parent=15 // pred_fallthru
          _
        // Predicated region
        $region37: #{tpu_custom_call.1} parent=15 // pred_check
          %p385 = pneg %p202
        $region38: #{tpu_custom_call.1} parent=15 // pred_check_branch
          %387 = sbr.rel (%p385) target = $region40
        $region39: #{tpu_custom_call.1} parent=15 // pred_region
          %p388 = scmp.lt.s32.totalorder %s35, 1
          %s389 = scalar_select %p388, %s35, 1
          %p390 = scmp.lt.s32.totalorder %s36, 0
          %s391 = scalar_select %p390, %s36, 0
          %s392 = sadd.s32 %s391, %s389
          %s393 = smul.addr %s392, 8
          %s394 = scalar_lea.vmem %s5, %s393
        $region40: #{tpu_custom_call.1} parent=15 // pred_fallthru
          _
        // Predicated region
        $region41: #{tpu_custom_call.1} parent=15 // pred_check
          %p395 = pneg %p230
        $region42: #{tpu_custom_call.1} parent=15 // pred_check_branch
          %397 = sbr.rel (%p395) target = $region44
        $region43: #{tpu_custom_call.1} parent=15 // pred_region
          %s398 = sand.u32 %s220, 1
          %s399 = scalar_lea.sflag [#allocation16], %s398
          %s400 = sand.u32 %s220, 1
          %s401 = smul.addr %s400, 8
          %s402 = scalar_lea.vmem [#allocation15], %s401
          %s404 = ssub.s32 128, 128
          %405 = vsyncadd %s399, %s404
          %s406 = sadd.s32 %s36, %s35
          %s407 = smul.addr %s406, 128
          %s408 = scalar_lea.hbm %s6, %s407
          %s410 = sshll.u32 %s402, 4
          %s411 = int_to_ptr.vmem [resolvable:$true] %s410
          %413 = dma.hbm_to_vmem [thread:$0]  %s408, 128, %s411, %s399
        $region44: #{tpu_custom_call.1} parent=15 // pred_fallthru
          _
      $region16: #{tpu_custom_call.1} parent=5 // pred_fallthru
        _
      %p414 = scmp.le.s32.totalorder 1, %s28
      %p415 = scmp.lt.s32.totalorder %s28, 3
      %p416 = pnand %p414, %p415
      %p417 = pneg %p416
      // Predicated region
      $region45: #{tpu_custom_call.1} parent=5 // pred_check
        _
      $region46: #{tpu_custom_call.1} parent=5 // pred_check_branch
        %419 = sbr.rel (%p416) target = $region48
      $region47: #{tpu_custom_call.1} parent=5 // pred_region
        %s420 = ssub.s32 %s28, 1
        %s421 = sand.u32 %s55, 1
        %s422 = scalar_lea.sflag [#allocation7], %s421
        %s423 = sand.u32 %s55, 1
        %s424 = smul.addr %s423, 32
        %s425 = scalar_lea.vmem [#allocation6], %s424
        // Predicated region
        $region49: #{tpu_custom_call.1} parent=47 // pred_check
          %p426 = pneg %p68
        $region50: #{tpu_custom_call.1} parent=47 // pred_check_branch
          %428 = sbr.rel (%p426) target = $region52
        $region51: #{tpu_custom_call.1} parent=47 // pred_region
          %429 = dma.done %s422, 512
        $region52: #{tpu_custom_call.1} parent=47 // pred_fallthru
          _
        %s430 = sand.u32 %s33, 1
        %s431 = scalar_lea.sflag [#allocation10], %s430
        %s432 = sand.u32 %s83, 1
        %s433 = smul.addr %s432, 32
        %s434 = scalar_lea.vmem [#allocation9], %s433
        // Predicated region
        $region53: #{tpu_custom_call.1} parent=47 // pred_check
          %p435 = pneg %p96
        $region54: #{tpu_custom_call.1} parent=47 // pred_check_branch
          %437 = sbr.rel (%p435) target = $region56
        $region55: #{tpu_custom_call.1} parent=47 // pred_region
          %438 = dma.done %s431, 512
        $region56: #{tpu_custom_call.1} parent=47 // pred_fallthru
          _
        %s439 = sand.u32 %s33, 1
        %s440 = scalar_lea.sflag [#allocation10], %s439
        %s441 = sand.u32 %s111, 1
        %s442 = smul.addr %s441, 8
        %s443 = scalar_lea.vmem [#allocation11], %s442
        // Predicated region
        $region57: #{tpu_custom_call.1} parent=47 // pred_check
          %p444 = pneg %p124
        $region58: #{tpu_custom_call.1} parent=47 // pred_check_branch
          %446 = sbr.rel (%p444) target = $region60
        $region59: #{tpu_custom_call.1} parent=47 // pred_region
          %447 = dma.done %s440, 128
        $region60: #{tpu_custom_call.1} parent=47 // pred_fallthru
          _
        %s448 = sand.u32 %s33, 1
        %s449 = scalar_lea.sflag [#allocation13], %s448
        %s450 = sand.u32 %s139, 1
        %s451 = smul.addr %s450, 8
        %s452 = scalar_lea.vmem [#allocation12], %s451
        // Predicated region
        $region61: #{tpu_custom_call.1} parent=47 // pred_check
          %p453 = pneg %p152
        $region62: #{tpu_custom_call.1} parent=47 // pred_check_branch
          %455 = sbr.rel (%p453) target = $region64
        $region63: #{tpu_custom_call.1} parent=47 // pred_region
          %456 = dma.done %s449, 128
        $region64: #{tpu_custom_call.1} parent=47 // pred_fallthru
          _
        %s457 = sand.u32 %s33, 1
        %s458 = scalar_lea.sflag [#allocation13], %s457
        %s459 = sand.u32 %s167, 1
        %s460 = smul.addr %s459, 64
        %s461 = scalar_lea.vmem [#allocation14], %s460
        // Predicated region
        $region65: #{tpu_custom_call.1} parent=47 // pred_check
          %p462 = pneg %p180
        $region66: #{tpu_custom_call.1} parent=47 // pred_check_branch
          %464 = sbr.rel (%p462) target = $region68
        $region67: #{tpu_custom_call.1} parent=47 // pred_region
          %465 = dma.done %s458, 1024
        $region68: #{tpu_custom_call.1} parent=47 // pred_fallthru
          _
        %s466 = sand.u32 %s223, 1
        %s467 = scalar_lea.sflag [#allocation16], %s466
        %s468 = sand.u32 %s223, 1
        %s469 = smul.addr %s468, 8
        %s470 = scalar_lea.vmem [#allocation15], %s469
        // Predicated region
        $region69: #{tpu_custom_call.1} parent=47 // pred_check
          %p471 = pneg %p236
        $region70: #{tpu_custom_call.1} parent=47 // pred_check_branch
          %473 = sbr.rel (%p471) target = $region72
        $region71: #{tpu_custom_call.1} parent=47 // pred_region
          %474 = dma.done %s467, 128
        $region72: #{tpu_custom_call.1} parent=47 // pred_fallthru
          _
        %s475 = sand.u32 %s55, 1
        %s476 = scalar_lea.sflag [#allocation7], %s475
        %s477 = sand.u32 %s55, 1
        %s478 = smul.addr %s477, 32
        %s479 = scalar_lea.vmem [#allocation6], %s478
        %p480 = pneg %p68
        %p481 = pneg %p65
        %s482 = sand.u32 %s33, 1
        %s483 = scalar_lea.sflag [#allocation10], %s482
        %s484 = sand.u32 %s83, 1
        %s485 = smul.addr %s484, 32
        %s486 = scalar_lea.vmem [#allocation9], %s485
        %p487 = pneg %p96
        %p488 = pneg %p93
        %s489 = sand.u32 %s33, 1
        %s490 = scalar_lea.sflag [#allocation10], %s489
        %s491 = sand.u32 %s111, 1
        %s492 = smul.addr %s491, 8
        %s493 = scalar_lea.vmem [#allocation11], %s492
        %p494 = pneg %p124
        %p495 = pneg %p121
        %s496 = sand.u32 %s33, 1
        %s497 = scalar_lea.sflag [#allocation13], %s496
        %s498 = sand.u32 %s139, 1
        %s499 = smul.addr %s498, 8
        %s500 = scalar_lea.vmem [#allocation12], %s499
        %p501 = pneg %p152
        %p502 = pneg %p149
        %s503 = sand.u32 %s33, 1
        %s504 = scalar_lea.sflag [#allocation13], %s503
        %s505 = sand.u32 %s167, 1
        %s506 = smul.addr %s505, 64
        %s507 = scalar_lea.vmem [#allocation14], %s506
        %p508 = pneg %p180
        %p509 = pneg %p177
        %p510 = scmp.lt.s32.totalorder %s37, 1
        %s511 = scalar_select %p510, %s37, 1
        %p512 = scmp.lt.s32.totalorder %s38, 0
        %s513 = scalar_select %p512, %s38, 0
        %s514 = sadd.s32 %s513, %s511
        %s515 = smul.addr %s514, 8
        %s516 = scalar_lea.vmem %s5, %s515
        %p517 = pneg %p208
        %p518 = pneg %p205
        %s519 = sand.u32 %s223, 1
        %s520 = scalar_lea.sflag [#allocation16], %s519
        %s521 = sand.u32 %s223, 1
        %s522 = smul.addr %s521, 8
        %s523 = scalar_lea.vmem [#allocation15], %s522
        %p524 = pneg %p236
        %p525 = pneg %p233
        %p526 = pneg %p262
        %p527 = pneg %p259
        %s528 = sand.u32 %s249, 1
        %s529 = scalar_lea.sflag [#allocation8], %s528
        %s530 = sand.u32 %s249, 1
        %s531 = scalar_lea.vmem [#allocation17], %s530
        %p532 = scmp.lt.s32.totalorder %s37, 1
        %s533 = scalar_select %p532, %s37, 1
        %p534 = scmp.lt.s32.totalorder %s38, 0
        %s535 = scalar_select %p534, %s38, 0
        %s536 = sadd.s32 %s535, %s533
        %s537 = smul.addr %s536, 8
        %s538 = scalar_lea.vmem %s5, %s537
        %p539 = scmp.eq.s32.totalorder %s38, 0
        // Predicated region
        $region73: #{tpu_custom_call.1} parent=47 // pred_check
          %p540 = pneg %p539
        $region74: #{tpu_custom_call.1} parent=47 // pred_check_branch
          %542 = sbr.rel (%p540) target = $region76
        $region75: #{tpu_custom_call.1} parent=47 // pred_region
          %vm543 = vcmask 261120
          %544 = vst.msk [vmem:[#allocation2] sm:$0xff] %vm543, 0.0
          %545 = vst.msk [vmem:[#allocation3] sm:$0xff] %vm543, 0.0
          %546 = vst.msk [vmem:[#allocation4] sm:$0xff] %vm543, 0.0
          %547 = vst.msk [vmem:[#allocation5] sm:$0xff] %vm543, 0.0
        $region76: #{tpu_custom_call.1} parent=47 // pred_fallthru
          _
        %v548 = vld [vmem:[%s470] sm:$0xff]
        %vm549 = vcmp.gt.f32.partialorder %v548, 0.0
        %v550 = vld [vmem:[%s425] sm:$0xff]
        %s551 = scalar_lea.vmem %s425, 8 [#allocation6]
        %v552 = vld [vmem:[%s551] sm:$0xff]
        %s553 = scalar_lea.vmem %s425, 16 [#allocation6]
        %v554 = vld [vmem:[%s553] sm:$0xff]
        %s555 = scalar_lea.vmem %s425, 24 [#allocation6]
        %v556 = vld [vmem:[%s555] sm:$0xff]
        %v557 = vld [vmem:[%s434] sm:$0xff]
        %s558 = scalar_lea.vmem %s434, 8 [#allocation9]
        %v559 = vld [vmem:[%s558] sm:$0xff]
        %s560 = scalar_lea.vmem %s434, 16 [#allocation9]
        %v561 = vld [vmem:[%s560] sm:$0xff]
        %s562 = scalar_lea.vmem %s434, 24 [#allocation9]
        %v563 = vld [vmem:[%s562] sm:$0xff]
        %v564 = vadd.f32 %v550, %v554
        %v565 = vadd.f32 %v552, %v556
        %v566 = vmul.f32 %v564, %v565
        %v567 = vadd.f32 %v557, %v561
        %v568 = vadd.f32 %v559, %v563
        %v569 = vmul.f32 %v567, %v568
        %v570 = vmax.f32 %v550, %v557
        %v571 = vmax.f32 %v554, %v561
        %v572 = vadd.f32 %v570, %v571
        %v573 = vmax.f32 %v552, %v559
        %v574 = vmax.f32 %v556, %v563
        %v575 = vadd.f32 %v573, %v574
        %v576 = vmul.f32 %v572, %v575
        %v577 = vmin.f32 %v554, %v561
        %v578 = vmin.f32 %v550, %v557
        %v579 = vadd.f32 %v577, %v578
        %v580 = vmin.f32 %v556, %v563
        %v581 = vmin.f32 %v552, %v559
        %v582 = vadd.f32 %v580, %v581
        %v583 = vmul.f32 %v579, %v582
        %v584 = vadd.f32 %v569, %v566
        %v585 = vsub.f32 %v584, %v583
        %v586 = vrcp.pop %v585
        %v587 = vmul.f32 %v583, %v586
        %v588 = vsub.f32 %v576, %v585
        %v589 = vmax.f32 %v576, 1e-06
        %v590 = vrcp.pop %v589
        %v591 = vmul.f32 %v588, %v590
        %v592 = vsub.f32 %v587, %v591
        %v593 = vld [vmem:[#allocation2] sm:$0xff]
        %v594 = vsub.f32 1.0, %v592
        %v595 = vsel %vm549, %v594, 0.0
        %v596 = vadd.f32 %v593, %v595
        %vm597 = vcmask 261120
        %598 = vst.msk [vmem:[#allocation2] sm:$0xff] %vm597, %v596
        %v599 = vld [vmem:[%s443] sm:$0xff]
        %v600 = vld [vmem:[%s452] sm:$0xff]
        %v601 = vlog2.pop %v599
        %v602 = vmul.f32 %v601, 0.6931472
        %v603 = vmax.f32 %v602, -100.0
        %v604 = vsub.f32 1.0, %v599
        %v605 = vlog2.pop %v604
        %v606 = vmul.f32 %v605, 0.6931472
        %v607 = vmax.f32 %v606, -100.0
        %v608 = vmul.f32 %v600, %v603
        %v609 = vsub.f32 1.0, %v600
        %v610 = vmul.f32 %v609, %v607
        %v611 = vadd.f32 %v608, %v610
        %v612 = vsub.f32 0.0, %v611
        %v613 = vld [vmem:[#allocation3] sm:$0xff]
        %v614 = vsel %vm549, %v612, 0.0
        %v615 = vadd.f32 %v613, %v614
        %616 = vst.msk [vmem:[#allocation3] sm:$0xff] %vm597, %v615
        %v617 = vld [vmem:[%s538] sm:$0xff]
        %v618 = vld [vmem:[%s461] sm:$0xff]
        %vm619 = vcmp.eq.s32.totalorder %v617, 0
        %v620 = vsub.f32 1.0, %v618
        %v621 = vsel %vm619, %v618, %v620
        %v622 = vsel %vm619, 0.25, 0.75
        %v623 = vsub.f32 1.0, %v621
        %v624 = vsub.f32 0.0, %v622
        %v625 = vmul.f32 %v624, %v623
        %v626 = vmul.f32 %v625, %v623
        %v627 = vlog2.pop %v621
        %v628 = vmul.f32 %v627, 0.6931472
        %v629 = vmul.f32 %v626, %v628
        %s630 = scalar_lea.vmem %s461, 8 [#allocation14]
        %v631 = vld [vmem:[%s630] sm:$0xff]
        %vm632 = vcmp.eq.s32.totalorder %v617, 1
        %v633 = vsub.f32 1.0, %v631
        %v634 = vsel %vm632, %v631, %v633
        %v635 = vsel %vm632, 0.25, 0.75
        %v636 = vsub.f32 1.0, %v634
        %v637 = vsub.f32 0.0, %v635
        %v638 = vmul.f32 %v637, %v636
        %v639 = vmul.f32 %v638, %v636
        %v640 = vlog2.pop %v634
        %v641 = vmul.f32 %v640, 0.6931472
        %v642 = vmul.f32 %v639, %v641
        %v643 = vadd.f32 %v629, %v642
        %s644 = scalar_lea.vmem %s461, 16 [#allocation14]
        %v645 = vld [vmem:[%s644] sm:$0xff]
        %vm646 = vcmp.eq.s32.totalorder %v617, 2
        %v647 = vsub.f32 1.0, %v645
        %v648 = vsel %vm646, %v645, %v647
        %v649 = vsel %vm646, 0.25, 0.75
        %v650 = vsub.f32 1.0, %v648
        %v651 = vsub.f32 0.0, %v649
        %v652 = vmul.f32 %v651, %v650
        %v653 = vmul.f32 %v652, %v650
        %v654 = vlog2.pop %v648
        %v655 = vmul.f32 %v654, 0.6931472
        %v656 = vmul.f32 %v653, %v655
        %v657 = vadd.f32 %v643, %v656
        %s658 = scalar_lea.vmem %s461, 24 [#allocation14]
        %v659 = vld [vmem:[%s658] sm:$0xff]
        %vm660 = vcmp.eq.s32.totalorder %v617, 3
        %v661 = vsub.f32 1.0, %v659
        %v662 = vsel %vm660, %v659, %v661
        %v663 = vsel %vm660, 0.25, 0.75
        %v664 = vsub.f32 1.0, %v662
        %v665 = vsub.f32 0.0, %v663
        %v666 = vmul.f32 %v665, %v664
        %v667 = vmul.f32 %v666, %v664
        %v668 = vlog2.pop %v662
        %v669 = vmul.f32 %v668, 0.6931472
        %v670 = vmul.f32 %v667, %v669
        %v671 = vadd.f32 %v657, %v670
        %s672 = scalar_lea.vmem %s461, 32 [#allocation14]
        %v673 = vld [vmem:[%s672] sm:$0xff]
        %vm674 = vcmp.eq.s32.totalorder %v617, 4
        %v675 = vsub.f32 1.0, %v673
        %v676 = vsel %vm674, %v673, %v675
        %v677 = vsel %vm674, 0.25, 0.75
        %v678 = vsub.f32 1.0, %v676
        %v679 = vsub.f32 0.0, %v677
        %v680 = vmul.f32 %v679, %v678
        %v681 = vmul.f32 %v680, %v678
        %v682 = vlog2.pop %v676
        %v683 = vmul.f32 %v682, 0.6931472
        %v684 = vmul.f32 %v681, %v683
        %v685 = vadd.f32 %v671, %v684
        %s686 = scalar_lea.vmem %s461, 40 [#allocation14]
        %v687 = vld [vmem:[%s686] sm:$0xff]
        %vm688 = vcmp.eq.s32.totalorder %v617, 5
        %v689 = vsub.f32 1.0, %v687
        %v690 = vsel %vm688, %v687, %v689
        %v691 = vsel %vm688, 0.25, 0.75
        %v692 = vsub.f32 1.0, %v690
        %v693 = vsub.f32 0.0, %v691
        %v694 = vmul.f32 %v693, %v692
        %v695 = vmul.f32 %v694, %v692
        %v696 = vlog2.pop %v690
        %v697 = vmul.f32 %v696, 0.6931472
        %v698 = vmul.f32 %v695, %v697
        %v699 = vadd.f32 %v685, %v698
        %s700 = scalar_lea.vmem %s461, 48 [#allocation14]
        %v701 = vld [vmem:[%s700] sm:$0xff]
        %vm702 = vcmp.eq.s32.totalorder %v617, 6
        %v703 = vsub.f32 1.0, %v701
        %v704 = vsel %vm702, %v701, %v703
        %v705 = vsel %vm702, 0.25, 0.75
        %v706 = vsub.f32 1.0, %v704
        %v707 = vsub.f32 0.0, %v705
        %v708 = vmul.f32 %v707, %v706
        %v709 = vmul.f32 %v708, %v706
        %v710 = vlog2.pop %v704
        %v711 = vmul.f32 %v710, 0.6931472
        %v712 = vmul.f32 %v709, %v711
        %v713 = vadd.f32 %v699, %v712
        %s714 = scalar_lea.vmem %s461, 56 [#allocation14]
        %v715 = vld [vmem:[%s714] sm:$0xff]
        %vm716 = vcmp.eq.s32.totalorder %v617, 7
        %v717 = vsub.f32 1.0, %v715
        %v718 = vsel %vm716, %v715, %v717
        %v719 = vsel %vm716, 0.25, 0.75
        %v720 = vsub.f32 1.0, %v718
        %v721 = vsub.f32 0.0, %v719
        %v722 = vmul.f32 %v721, %v720
        %v723 = vmul.f32 %v722, %v720
        %v724 = vlog2.pop %v718
        %v725 = vmul.f32 %v724, 0.6931472
        %v726 = vmul.f32 %v723, %v725
        %v727 = vadd.f32 %v713, %v726
        %v728 = vld [vmem:[#allocation4] sm:$0xff]
        %v729 = vadd.f32 %v728, %v727
        %730 = vst.msk [vmem:[#allocation4] sm:$0xff] %vm597, %v729
        %v731 = vld [vmem:[#allocation5] sm:$0xff]
        %v732 = vadd.f32 %v731, %v548
        %733 = vst.msk [vmem:[#allocation5] sm:$0xff] %vm597, %v732
        // Predicated region
        $region77: #{tpu_custom_call.1} parent=47 // pred_check
          %p734 = pneg %p539
        $region78: #{tpu_custom_call.1} parent=47 // pred_check_branch
          %736 = sbr.rel (%p734) target = $region80
        $region79: #{tpu_custom_call.1} parent=47 // pred_region
          %v737 = vlaneseq
          %v738 = vand.u32 %v737, 127
          %v739 = vld [vmem:[#allocation2] sm:$0xff]
          %v740 = vsel %vm597, %v739, 0.0
          %741 = vadd.xlane.f32.xlu0 %v740
          %v742 = vpop.xlane.xlu0 %741
          %v743 = vrot.slane %v742, 4
          %v744 = vadd.f32 %v742, %v743
          %v745 = vrot.slane %v744, 2
          %v746 = vadd.f32 %v744, %v745
          %v747 = vrot.slane %v746, 1
          %v748 = vadd.f32 %v746, %v747
          %s749 = vtos %v748
          %v750 = vld [vmem:[#allocation3] sm:$0xff]
          %v751 = vsel %vm597, %v750, 0.0
          %752 = vadd.xlane.f32.xlu0 %v751
          %v753 = vpop.xlane.xlu0 %752
          %v754 = vrot.slane %v753, 4
          %v755 = vadd.f32 %v753, %v754
          %v756 = vrot.slane %v755, 2
          %v757 = vadd.f32 %v755, %v756
          %v758 = vrot.slane %v757, 1
          %v759 = vadd.f32 %v757, %v758
          %s760 = vtos %v759
          %v761 = vld [vmem:[#allocation4] sm:$0xff]
          %v762 = vsel %vm597, %v761, 0.0
          %763 = vadd.xlane.f32.xlu0 %v762
          %v764 = vpop.xlane.xlu0 %763
          %v765 = vrot.slane %v764, 4
          %v766 = vadd.f32 %v764, %v765
          %v767 = vrot.slane %v766, 2
          %v768 = vadd.f32 %v766, %v767
          %v769 = vrot.slane %v768, 1
          %v770 = vadd.f32 %v768, %v769
          %s771 = vtos %v770
          %v772 = vld [vmem:[#allocation5] sm:$0xff]
          %v773 = vsel %vm597, %v772, 0.0
          %774 = vadd.xlane.f32.xlu0 %v773
          %v775 = vpop.xlane.xlu0 %774
          %v776 = vrot.slane %v775, 4
          %v777 = vadd.f32 %v775, %v776
          %v778 = vrot.slane %v777, 2
          %v779 = vadd.f32 %v777, %v778
          %v780 = vrot.slane %v779, 1
          %v781 = vadd.f32 %v779, %v780
          %s782 = vtos %v781
          %vm783 = vcmp.eq.s32.totalorder %v738, 0
          %v784 = vstv %s749
          %v785 = vsel %vm783, %v784, 0.0
          %vm786 = vcmp.eq.s32.totalorder %v738, 1
          %v787 = vstv %s760
          %v788 = vsel %vm786, %v787, 0.0
          %v789 = vadd.f32 %v785, %v788
          %vm790 = vcmp.eq.s32.totalorder %v738, 2
          %v791 = vstv %s771
          %v792 = vsel %vm790, %v791, 0.0
          %v793 = vadd.f32 %v789, %v792
          %vm794 = vcmp.eq.s32.totalorder %v738, 3
          %v795 = vstv %s782
          %v796 = vsel %vm794, %v795, 0.0
          %v797 = vadd.f32 %v793, %v796
          %798 = vst [vmem:[%s531] sm:$0x1] %v797
        $region80: #{tpu_custom_call.1} parent=47 // pred_fallthru
          _
        %s799 = sand.u32 %s249, 1
        %s800 = scalar_lea.sflag [#allocation8], %s799
        %s801 = sand.u32 %s249, 1
        %s802 = scalar_lea.vmem [#allocation17], %s801
        // Predicated region
        $region81: #{tpu_custom_call.1} parent=47 // pred_check
          %p803 = pneg %p259
        $region82: #{tpu_custom_call.1} parent=47 // pred_check_branch
          %805 = sbr.rel (%p803) target = $region84
        $region83: #{tpu_custom_call.1} parent=47 // pred_region
          %s807 = ssub.s32 16, 16
          %808 = vsyncadd %s800, %s807
          %s809 = smul.addr %s37, 16
          %s810 = scalar_lea.hbm %s7, %s809
          %s812 = sshll.u32 %s802, 4
          %s813 = int_to_ptr.vmem [resolvable:$true] %s812
          %815 = dma.vmem_to_hbm [thread:$0]  %s813, 16, %s810, %s800
        $region84: #{tpu_custom_call.1} parent=47 // pred_fallthru
          _
      $region48: #{tpu_custom_call.1} parent=5 // pred_fallthru
        _
      %p816 = scmp.le.s32.totalorder 2, %s28
      // Predicated region
      $region85: #{tpu_custom_call.1} parent=5 // pred_check
        %p817 = pneg %p816
      $region86: #{tpu_custom_call.1} parent=5 // pred_check_branch
        %819 = sbr.rel (%p817) target = $region88
      $region87: #{tpu_custom_call.1} parent=5 // pred_region
        %s820 = ssub.s32 %s28, 2
        // Predicated region
        $region89: #{tpu_custom_call.1} parent=87 // pred_check
          %p821 = pneg %p265
        $region90: #{tpu_custom_call.1} parent=87 // pred_check_branch
          %823 = sbr.rel (%p821) target = $region92
        $region91: #{tpu_custom_call.1} parent=87 // pred_region
          %s824 = sand.u32 %s250, 1
          %s825 = scalar_lea.sflag [#allocation8], %s824
          %s826 = sand.u32 %s250, 1
          %s827 = scalar_lea.vmem [#allocation17], %s826
          %828 = dma.done %s825, 16
        $region92: #{tpu_custom_call.1} parent=87 // pred_fallthru
          _
      $region88: #{tpu_custom_call.1} parent=5 // pred_fallthru
        _
    $region6: #{tpu_custom_call.1} parent=1 // loop_footer
      %s32 = sadd.s32 1, %s28
    $region7: #{tpu_custom_call.1} parent=1 // loop_footer_branch
      %27 = sbr.rel target = $region3
    $region8: #{tpu_custom_call.1} parent=1 // loop_exit
      _
    %829 = vsyncpa [#allocation7], 1
    %s830 = scalar_lea.sflag [#allocation7], 1
    %831 = vsyncpa %s830, 1
    %832 = vsyncpa [#allocation10], 1
    %s833 = scalar_lea.sflag [#allocation10], 1
    %834 = vsyncpa %s833, 1
    %835 = vsyncpa [#allocation13], 1
    %s836 = scalar_lea.sflag [#allocation13], 1
    %837 = vsyncpa %s836, 1
    %838 = vsyncpa [#allocation16], 1
    %s839 = scalar_lea.sflag [#allocation16], 1
    %840 = vsyncpa %s839, 1
    %841 = vsyncpa [#allocation8], 1
    %s842 = scalar_lea.sflag [#allocation8], 1
    %843 = vsyncpa %s842, 1

</llo_original>
